<compile_context>
chip_gen: v6e
topology: v6e:2x2x1
jax: 0.10.0
libtpu: 0.0.40
codegen_flags: <defaults>
</compile_context>

<pallas_src>
import functools

import numpy as np
import jax
import jax.numpy as jnp
from jax import lax
from jax.experimental import pallas as pl
from jax.experimental.pallas import tpu as pltpu


def _vmem_limit_bytes(frac=0.8, fallback=64 * 1024 * 1024):
    """Scoped-VMEM limit sized to the actual part (v5e/v6e 128 MiB, v7x 64 MiB)."""
    try:
        return int(pltpu.get_tpu_info().vmem_capacity_bytes * frac)
    except Exception:
        return fallback


# ----------------------------------------------------------------------------------------
# Stage 1: hoisted input projection.  gates_x[d, m, :] = x[m, :] @ W_ih_t[d] + bias[d]
# One (tile_m, D) x (D, 4H) matmul per grid step, fully parallel grid, bf16 output.
# ----------------------------------------------------------------------------------------
def _input_proj_kernel(x_ref, wih_ref, b_ref, gx_ref):
    # x_ref:   (tile_m, D)     bf16
    # wih_ref: (1, D, 4H)      bf16   (pre-transposed in the wrapper)
    # b_ref:   (1, 1, 4H)      f32    (b_ih + b_hh)
    # gx_ref:  (1, tile_m, 4H) bf16
    acc = jnp.dot(x_ref[...], wih_ref[0], preferred_element_type=jnp.float32) + b_ref[0]
    gx_ref[0] = acc.astype(jnp.bfloat16)


# ----------------------------------------------------------------------------------------
# Stage 2: serial recurrence + running max-pool over time, T_CHUNK steps per grid step.
# W_hh^T lives in ONE resident VMEM copy per direction (manual DMA, no double buffer).
# ----------------------------------------------------------------------------------------
def _recurrent_maxpool_kernel(len_ref, gx_ref, whh_hbm, out_ref,
                              whh_vmem, dma_sem, h_scr, c_scr, *, t_orig):
    d = pl.program_id(0)              # direction: 0 = forward, 1 = backward
    ci = pl.program_id(1)             # chunk index within this direction's sweep
    n_chunks = pl.num_programs(1)
    t_chunk = gx_ref.shape[0]         # gx block is (t_chunk, B, 4H)
    B, H = h_scr.shape

    @pl.when(ci == 0)
    def _():
        # fresh zero state at the start of each direction, and fetch this direction's
        # W_hh^T into the single resident VMEM copy (single-buffered by construction).
        h_scr[...] = jnp.zeros_like(h_scr)
        c_scr[...] = jnp.zeros_like(c_scr)
        cp = pltpu.make_async_copy(whh_hbm.at[d], whh_vmem, dma_sem)
        cp.start()
        cp.wait()

    lens = len_ref[...]                                       # (B, 1) int32
    whh = whh_vmem[...]                                       # (H, 4H) bf16
    chunk_block = jnp.where(d == 0, ci, n_chunks - 1 - ci)
    chunk_base = chunk_block * t_chunk

    def step(s, carry):
        h_bf, c_f, mx = carry
        s_local = jnp.where(d == 0, s, t_chunk - 1 - s)       # in-chunk reversal (bwd)
        t_actual = chunk_base + s_local                       # real time index
        # gates_x already holds x_t @ W_ih^T + (b_ih + b_hh); add recurrent term on MXU.
        gates = (gx_ref[s_local].astype(jnp.float32)
                 + jnp.dot(h_bf, whh, preferred_element_type=jnp.float32))   # (B, 4H)
        # PyTorch LSTM gate order: i, f, g, o  (slices lane-aligned: H multiple of 128)
        i_g = jax.nn.sigmoid(gates[:, 0 * H:1 * H])
        f_g = jax.nn.sigmoid(gates[:, 1 * H:2 * H])
        g_g = jnp.tanh(gates[:, 2 * H:3 * H])
        o_g = jax.nn.sigmoid(gates[:, 3 * H:4 * H])
        c_new = f_g * c_f + i_g * g_g
        h_new = o_g * jnp.tanh(c_new)
        valid = lens > t_actual                               # packing mask (B, 1)
        # pad_packed pads with 0 inside [0, T); steps added only for chunk padding
        # (t >= T) must never win the max -> -inf.
        pad_val = jnp.where(t_actual < t_orig, 0.0, -jnp.inf)
        h_bf = jnp.where(valid, h_new.astype(jnp.bfloat16), h_bf)  # state frozen past end
        c_f = jnp.where(valid, c_new, c_f)
        mx = jnp.maximum(mx, jnp.where(valid, h_new, pad_val))
        return h_bf, c_f, mx

    mx0 = jnp.full((B, H), -jnp.inf, jnp.float32)
    h1, c1, mx = lax.fori_loop(0, t_chunk, step, (h_scr[...], c_scr[...], mx0),
                               unroll=True)
    h_scr[...] = h1
    c_scr[...] = c1

    # running max over chunks (output block resident across the chunk axis)
    @pl.when(ci == 0)
    def _():
        out_ref[0] = mx

    @pl.when(ci > 0)
    def _():
        out_ref[0] = jnp.maximum(out_ref[0], mx)


def blstm_encoder_forward(sent, sent_len, params, *, t_chunk=8, m_tile_rows=256):
    T, B, D = sent.shape
    w_ih, w_hh, bias = params["w_ih"], params["w_hh"], params["bias"]
    H = w_hh.shape[-1]
    G = 4 * H
    assert H % 128 == 0, "H must be a multiple of 128 (lane-aligned gate slices)"

    vmem_limit = _vmem_limit_bytes()

    n_chunks = (T + t_chunk - 1) // t_chunk
    T_pad = n_chunks * t_chunk

    # One-time HBM-side relayout: transpose weights (no .T in-kernel) and cast to bf16.
    w_ih_t = jnp.transpose(w_ih, (0, 2, 1)).astype(jnp.bfloat16)   # (2, D, 4H)
    w_hh_t = jnp.transpose(w_hh, (0, 2, 1)).astype(jnp.bfloat16)   # (2, H, 4H)
    bias_f32 = bias.astype(jnp.float32)                            # (2, 1, 4H)

    x_bf = sent.astype(jnp.bfloat16)
    if T_pad != T:
        x_bf = jnp.pad(x_bf, ((0, T_pad - T), (0, 0), (0, 0)))
    x_flat = x_bf.reshape(T_pad * B, D)                            # (M, D)
    lengths = sent_len.reshape(B, 1).astype(jnp.int32)

    # ---- Stage 1: input-projection matmul, tiled along M (rows = t_tile * B) ----
    M = T_pad * B
    cap = max(m_tile_rows, B)
    t_tile = 1
    for cand in range(T_pad, 0, -1):
        if T_pad % cand == 0 and cand * B <= cap:
            t_tile = cand
            break
    if (t_tile * B) % 16 != 0:          # keep bf16 sublane tiling happy for partial blocks
        t_tile = T_pad
    tile_m = t_tile * B
    n_m = T_pad // t_tile

    gx = pl.pallas_call(
        _input_proj_kernel,
        out_shape=jax.ShapeDtypeStruct((2, M, G), jnp.bfloat16),
        grid_spec=pltpu.PrefetchScalarGridSpec(
            num_scalar_prefetch=0,
            grid=(2, n_m),
            in_specs=[
                pl.BlockSpec((tile_m, D), lambda d, m: (m, 0)),    # x rows
                pl.BlockSpec((1, D, G), lambda d, m: (d, 0, 0)),   # W_ih^T per direction
                pl.BlockSpec((1, 1, G), lambda d, m: (d, 0, 0)),   # bias per direction
            ],
            out_specs=pl.BlockSpec((1, tile_m, G), lambda d, m: (d, m, 0)),
        ),
        compiler_params=pltpu.CompilerParams(
            dimension_semantics=("parallel", "parallel"),
            vmem_limit_bytes=vmem_limit),
    )(x_flat, w_ih_t, bias_f32)
    gates_x = gx.reshape(2, T_pad, B, G)     # free row-major reshape

    # ---- Stage 2: serial recurrence + max-pool (direction x time-chunks grid) ----
    out = pl.pallas_call(
        functools.partial(_recurrent_maxpool_kernel, t_orig=T),
        out_shape=jax.ShapeDtypeStruct((2, B, H), jnp.float32),
        grid_spec=pltpu.PrefetchScalarGridSpec(
            num_scalar_prefetch=0,
            grid=(2, n_chunks),
            in_specs=[
                pl.BlockSpec((B, 1), lambda d, c: (0, 0)),         # lengths (tiny, resident)
                pl.BlockSpec((None, t_chunk, B, G),                # this direction's gx chunk
                             lambda d, c, n=n_chunks: (d, jnp.where(d == 0, c, n - 1 - c),
                                                       0, 0)),
                pl.BlockSpec(memory_space=pl.ANY),                 # W_hh^T stays in HBM
            ],
            out_specs=pl.BlockSpec((1, B, H), lambda d, c: (d, 0, 0)),
            scratch_shapes=[
                pltpu.VMEM((H, G), jnp.bfloat16),   # single resident W_hh^T copy
                pltpu.SemaphoreType.DMA(()),        # its DMA semaphore
                pltpu.VMEM((B, H), jnp.bfloat16),   # h state (bf16: dot consumes bf16 h)
                pltpu.VMEM((B, H), jnp.float32),    # c state
            ],
        ),
        compiler_params=pltpu.CompilerParams(
            dimension_semantics=("parallel", "arbitrary"),
            vmem_limit_bytes=vmem_limit),
    )(lengths, gates_x, w_hh_t)

    # bidirectional output is [fwd | bwd] along hidden dim; max commutes with concat
    return jnp.concatenate([out[0], out[1]], axis=-1)   # (B, 2H)


# --------- pure-JAX reference (same packing + bf16/f32 mixed precision) for validation ---
def blstm_encoder_reference(sent, sent_len, params):
    T, B, D = sent.shape
    w_ih_t = jnp.transpose(params["w_ih"], (0, 2, 1)).astype(jnp.bfloat16)  # (2, D, 4H)
    w_hh_t = jnp.transpose(params["w_hh"], (0, 2, 1)).astype(jnp.bfloat16)  # (2, H, 4H)
    bias = params["bias"].astype(jnp.float32)                               # (2, 1, 4H)
    H = w_hh_t.shape[1]
    x_bf = sent.astype(jnp.bfloat16)

    # hoisted input projection, rounded to bf16 exactly like the kernel
    gx = jnp.einsum("tbd,zdg->ztbg", x_bf, w_ih_t,
                    preferred_element_type=jnp.float32) + bias[:, None]
    gx = gx.astype(jnp.bfloat16).astype(jnp.float32)                        # (2, T, B, 4H)

    def run_dir(z, reverse):
        h = jnp.zeros((B, H), jnp.float32)
        c = jnp.zeros((B, H), jnp.float32)
        outs = [None] * T
        order = range(T - 1, -1, -1) if reverse else range(T)
        for t in order:
            gates = gx[z, t] + jnp.dot(h.astype(jnp.bfloat16), w_hh_t[z],
                                       preferred_element_type=jnp.float32)
            i = jax.nn.sigmoid(gates[:, :H])
            f = jax.nn.sigmoid(gates[:, H:2 * H])
            g = jnp.tanh(gates[:, 2 * H:3 * H])
            o = jax.nn.sigmoid(gates[:, 3 * H:])
            c_new = f * c + i * g
            h_new = o * jnp.tanh(c_new)
            valid = (sent_len > t)[:, None]
            h = jnp.where(valid, h_new, h)
            c = jnp.where(valid, c_new, c)
            outs[t] = jnp.where(valid, h_new, 0.0)    # pad_packed pads with 0
        return jnp.stack(outs)                        # (T, B, H)

    fwd = run_dir(0, reverse=False)
    bwd = run_dir(1, reverse=True)
    full = jnp.concatenate([fwd, bwd], axis=-1)       # (T, B, 2H)
    return jnp.max(full, axis=0)                      # torch.max(sent_output, 0)[0]


if __name__ == "__main__":
    # Small synthetic shapes (module: D=300, H=2048).  B multiple of 8, H multiple of 128.
    # T=10 with t_chunk=4 exercises cross-chunk state carry AND the padded-time-step path;
    # m_tile_rows=32 exercises the multi-tile Stage-1 path.
    T, B, D, H = 10, 8, 64, 128

    key = jax.random.PRNGKey(0)
    k_x, k_wih, k_whh, k_bih, k_bhh = jax.random.split(key, 5)

    bound = 1.0 / np.sqrt(H)      # PyTorch nn.LSTM default uniform init
    params = {
        "w_ih": jax.random.uniform(k_wih, (2, 4 * H, D), jnp.float32, -bound, bound),
        "w_hh": jax.random.uniform(k_whh, (2, 4 * H, H), jnp.float32, -bound, bound),
        # b_ih + b_hh folded together (nn.LSTM adds both biases)
        "bias": (jax.random.uniform(k_bih, (2, 1, 4 * H), jnp.float32, -bound, bound)
                 + jax.random.uniform(k_bhh, (2, 1, 4 * H), jnp.float32, -bound, bound)),
    }

    sent = jax.random.normal(k_x, (T, B, D), jnp.float32)            # time-major embeddings
    sent_len = jnp.array([10, 9, 8, 7, 5, 3, 2, 1], jnp.int32)       # variable lengths

    forward = jax.jit(functools.partial(blstm_encoder_forward, t_chunk=4, m_tile_rows=32))
    emb = jax.block_until_ready(forward(sent, sent_len, params))
    ref = jax.block_until_ready(blstm_encoder_reference(sent, sent_len, params))

    assert emb.shape == (B, 2 * H), emb.shape
    # bf16 matmul operands + bf16 gates_x (f32 accumulation) -> loose-ish tolerance.
    np.testing.assert_allclose(np.asarray(emb), np.asarray(ref), rtol=2e-2, atol=2e-2)
    print("KERNEL_OK")
</pallas_src>

<mosaic_0001>
module attributes {stable_mosaic.version = 11 : i64} {
  func.func @_input_proj_kernel(%arg0: i32, %arg1: i32, %arg2: memref<32x64xbf16, #tpu.memory_space<vmem>>, %arg3: memref<1x64x512xbf16, #tpu.memory_space<vmem>>, %arg4: memref<1x1x512xf32, #tpu.memory_space<vmem>>, %arg5: memref<1x32x512xbf16, #tpu.memory_space<vmem>>) attributes {dimension_semantics = [#tpu.dimension_semantics<parallel>, #tpu.dimension_semantics<parallel>], iteration_bounds = array<i64: 2, 3>, scalar_prefetch = 0 : i64, scratch_operands = 0 : i64, tpu.core_type = #tpu.core_type<tc>, window_params = [{transform_indices = @transform_0, window_bounds = array<i64: 32, 64>}, {transform_indices = @transform_1, window_bounds = array<i64: 1, 64, 512>}, {transform_indices = @transform_2, window_bounds = array<i64: 1, 1, 512>}, {transform_indices = @transform_3, window_bounds = array<i64: 1, 32, 512>}]} {
    %c0 = arith.constant 0 : index
    %c0_0 = arith.constant 0 : index
    %0 = vector.load %arg2[%c0, %c0_0] : memref<32x64xbf16, #tpu.memory_space<vmem>>, vector<32x64xbf16>
    %c0_1 = arith.constant 0 : index
    %c0_2 = arith.constant 0 : index
    %c0_3 = arith.constant 0 : index
    %1 = vector.load %arg3[%c0_1, %c0_2, %c0_3] : memref<1x64x512xbf16, #tpu.memory_space<vmem>>, vector<1x64x512xbf16>
    %2 = vector.shape_cast %1 : vector<1x64x512xbf16> to vector<64x512xbf16>
    %cst = arith.constant dense<0.000000e+00> : vector<32x512xf32>
    %3 = tpu.matmul %0, %2, %cst {dimension_numbers = #tpu.dot_dimension_numbers<[1], [0], [0], [1], [0, 0, 1, 1], [], []>} : vector<32x64xbf16>, vector<64x512xbf16>, vector<32x512xf32> -> vector<32x512xf32>
    %c0_4 = arith.constant 0 : index
    %c0_5 = arith.constant 0 : index
    %c0_6 = arith.constant 0 : index
    %4 = vector.load %arg4[%c0_4, %c0_5, %c0_6] : memref<1x1x512xf32, #tpu.memory_space<vmem>>, vector<1x1x512xf32>
    %5 = vector.shape_cast %4 : vector<1x1x512xf32> to vector<1x512xf32>
    %6 = vector.broadcast %5 : vector<1x512xf32> to vector<32x512xf32>
    %7 = arith.addf %3, %6 : vector<32x512xf32>
    %8 = arith.truncf %7 : vector<32x512xf32> to vector<32x512xbf16>
    %c0_7 = arith.constant 0 : index
    %c0_8 = arith.constant 0 : index
    %c0_9 = arith.constant 0 : index
    %9 = vector.load %arg5[%c0_7, %c0_8, %c0_9] : memref<1x32x512xbf16, #tpu.memory_space<vmem>>, vector<1x32x512xbf16>
    %10 = vector.shape_cast %9 : vector<1x32x512xbf16> to vector<32x512xbf16>
    %11 = vector.shape_cast %8 : vector<32x512xbf16> to vector<1x32x512xbf16>
    tpu.vector_store %arg5[%c0_7, %c0_8, %c0_9], %11 {strides = array<i32>} : memref<1x32x512xbf16, #tpu.memory_space<vmem>>, vector<1x32x512xbf16>,
    return
  }
  func.func @transform_0(%arg0: i32, %arg1: i32) -> (i32, i32) {
    %c0_i32 = arith.constant 0 : i32
    %c0_i32_0 = arith.constant 0 : i32
    return %arg1, %c0_i32 : i32, i32
  }
  func.func @transform_1(%arg0: i32, %arg1: i32) -> (i32, i32, i32) {
    %c0_i32 = arith.constant 0 : i32
    %c0_i32_0 = arith.constant 0 : i32
    %c0_i32_1 = arith.constant 0 : i32
    return %arg0, %c0_i32, %c0_i32_0 : i32, i32, i32
  }
  func.func @transform_2(%arg0: i32, %arg1: i32) -> (i32, i32, i32) {
    %c0_i32 = arith.constant 0 : i32
    %c0_i32_0 = arith.constant 0 : i32
    %c0_i32_1 = arith.constant 0 : i32
    return %arg0, %c0_i32, %c0_i32_0 : i32, i32, i32
  }
  func.func @transform_3(%arg0: i32, %arg1: i32) -> (i32, i32, i32) {
    %c0_i32 = arith.constant 0 : i32
    %c0_i32_0 = arith.constant 0 : i32
    return %arg0, %arg1, %c0_i32 : i32, i32, i32
  }
}

module attributes {stable_mosaic.version = 11 : i64} {
  func.func @_recurrent_maxpool_kernel(%arg0: i32, %arg1: i32, %arg2: memref<8x1xi32, #tpu.memory_space<vmem>>, %arg3: memref<1x4x8x512xbf16, #tpu.memory_space<vmem>>, %arg4: memref<2x128x512xbf16, #tpu.memory_space<any>>, %arg5: memref<1x8x128xf32, #tpu.memory_space<vmem>>, %arg6: memref<128x512xbf16, #tpu.memory_space<vmem>>, %arg7: memref<!tpu.dma_semaphore, #tpu.memory_space<semaphore_mem>>, %arg8: memref<8x128xbf16, #tpu.memory_space<vmem>>, %arg9: memref<8x128xf32, #tpu.memory_space<vmem>>) attributes {dimension_semantics = [#tpu.dimension_semantics<parallel>, #tpu.dimension_semantics<arbitrary>], iteration_bounds = array<i64: 2, 3>, scalar_prefetch = 0 : i64, scratch_operands = 4 : i64, tpu.core_type = #tpu.core_type<tc>, window_params = [{pipeline_mode = #tpu.pipeline_mode<synchronous>, transform_indices = @transform_0, window_bounds = array<i64: 8, 1>}, {transform_indices = @transform_1, window_bounds = array<i64: 1, 4, 8, 512>}, {}, {transform_indices = @transform_3, window_bounds = array<i64: 1, 8, 128>}]} {
    %c0_i32 = arith.constant 0 : i32
    %0 = arith.cmpi eq, %arg1, %c0_i32 : i32
    %1 = arith.extui %0 : i1 to i32
    %c0_i32_0 = arith.constant 0 : i32
    %2 = arith.cmpi ne, %1, %c0_i32_0 : i32
    scf.if %2 {
      %cst_67 = arith.constant 0.000000e+00 : bf16
      %224 = vector.broadcast %cst_67 : bf16 to vector<8x128xbf16>
      %c0_68 = arith.constant 0 : index
      %c0_69 = arith.constant 0 : index
      %225 = vector.load %arg8[%c0_68, %c0_69] : memref<8x128xbf16, #tpu.memory_space<vmem>>, vector<8x128xbf16>
      tpu.vector_store %arg8[%c0_68, %c0_69], %224 {strides = array<i32>} : memref<8x128xbf16, #tpu.memory_space<vmem>>, vector<8x128xbf16>,
      %cst_70 = arith.constant 0.000000e+00 : f32
      %226 = vector.broadcast %cst_70 : f32 to vector<8x128xf32>
      %c0_71 = arith.constant 0 : index
      %c0_72 = arith.constant 0 : index
      %227 = vector.load %arg9[%c0_71, %c0_72] : memref<8x128xf32, #tpu.memory_space<vmem>>, vector<8x128xf32>
      tpu.vector_store %arg9[%c0_71, %c0_72], %226 {strides = array<i32>} : memref<8x128xf32, #tpu.memory_space<vmem>>, vector<8x128xf32>,
      %c0_i32_73 = arith.constant 0 : i32
      %c0_i32_74 = arith.constant 0 : i32
      %228 = tpu.memref_slice %arg4[%arg0, %c0_i32_73, %c0_i32_74] : memref<2x128x512xbf16, #tpu.memory_space<any>> -> memref<1x128x512xbf16, #tpu.memory_space<any>>
      %229 = tpu.memref_squeeze %228 : memref<1x128x512xbf16, #tpu.memory_space<any>> -> memref<128x512xbf16, #tpu.memory_space<any>>
      tpu.enqueue_dma source(%229 : memref<128x512xbf16, #tpu.memory_space<any>>) target(%arg6 : memref<128x512xbf16, #tpu.memory_space<vmem>>) target_semaphore(%arg7 : memref<!tpu.dma_semaphore, #tpu.memory_space<semaphore_mem>>)
      %c0_i32_75 = arith.constant 0 : i32
      %c0_i32_76 = arith.constant 0 : i32
      %230 = tpu.memref_slice %arg4[%arg0, %c0_i32_75, %c0_i32_76] : memref<2x128x512xbf16, #tpu.memory_space<any>> -> memref<1x128x512xbf16, #tpu.memory_space<any>>
      %231 = tpu.memref_squeeze %230 : memref<1x128x512xbf16, #tpu.memory_space<any>> -> memref<128x512xbf16, #tpu.memory_space<any>>
      tpu.wait_dma2 semaphore(%arg7 : memref<!tpu.dma_semaphore, #tpu.memory_space<semaphore_mem>>) src(%231 : memref<128x512xbf16, #tpu.memory_space<any>>) dst(%arg6 : memref<128x512xbf16, #tpu.memory_space<vmem>>)
    } else {
    }
    %c0 = arith.constant 0 : index
    %c0_1 = arith.constant 0 : index
    %3 = vector.load %arg2[%c0, %c0_1] : memref<8x1xi32, #tpu.memory_space<vmem>>, vector<8x1xi32>
    %c0_2 = arith.constant 0 : index
    %c0_3 = arith.constant 0 : index
    %4 = vector.load %arg6[%c0_2, %c0_3] : memref<128x512xbf16, #tpu.memory_space<vmem>>, vector<128x512xbf16>
    %c0_i32_4 = arith.constant 0 : i32
    %5 = arith.cmpi eq, %arg0, %c0_i32_4 : i32
    %c2_i32 = arith.constant 2 : i32
    %6 = arith.subi %c2_i32, %arg1 : i32
    %7 = arith.select %5, %arg1, %6 : i32
    %c4_i32 = arith.constant 4 : i32
    %8 = arith.muli %7, %c4_i32 : i32
    %cst = arith.constant 0xFF800000 : f32
    %9 = vector.broadcast %cst : f32 to vector<8x128xf32>
    %c0_5 = arith.constant 0 : index
    %c0_6 = arith.constant 0 : index
    %10 = vector.load %arg8[%c0_5, %c0_6] : memref<8x128xbf16, #tpu.memory_space<vmem>>, vector<8x128xbf16>
    %c0_7 = arith.constant 0 : index
    %c0_8 = arith.constant 0 : index
    %11 = vector.load %arg9[%c0_7, %c0_8] : memref<8x128xf32, #tpu.memory_space<vmem>>, vector<8x128xf32>
    %c0_i32_9 = arith.constant 0 : i32
    %c0_i32_10 = arith.constant 0 : i32
    %12 = arith.cmpi eq, %arg0, %c0_i32_10 : i32
    %c3_i32 = arith.constant 3 : i32
    %13 = arith.subi %c3_i32, %c0_i32_9 : i32
    %14 = arith.select %12, %c0_i32_9, %13 : i32
    %15 = arith.addi %8, %14 : i32
    %c0_11 = arith.constant 0 : index
    %16 = arith.index_cast %14 : i32 to index
    %c0_12 = arith.constant 0 : index
    %c0_13 = arith.constant 0 : index
    %17 = vector.load %arg3[%c0_11, %16, %c0_12, %c0_13] : memref<1x4x8x512xbf16, #tpu.memory_space<vmem>>, vector<1x1x8x512xbf16>
    %18 = vector.shape_cast %17 : vector<1x1x8x512xbf16> to vector<8x512xbf16>
    %19 = arith.extf %18 : vector<8x512xbf16> to vector<8x512xf32>
    %cst_14 = arith.constant dense<0.000000e+00> : vector<8x512xf32>
    %20 = tpu.matmul %10, %4, %cst_14 {dimension_numbers = #tpu.dot_dimension_numbers<[1], [0], [0], [1], [0, 0, 1, 1], [], []>} : vector<8x128xbf16>, vector<128x512xbf16>, vector<8x512xf32> -> vector<8x512xf32>
    %21 = arith.addf %19, %20 : vector<8x512xf32>
    %22 = vector.extract_strided_slice %21 {offsets = [0, 0], sizes = [8, 128], strides = [1, 1]} : vector<8x512xf32> to vector<8x128xf32>
    %23 = arith.negf %22 : vector<8x128xf32>
    %24 = math.exp %23 : vector<8x128xf32>
    %cst_15 = arith.constant 1.000000e+00 : f32
    %25 = vector.broadcast %cst_15 : f32 to vector<8x128xf32>
    %26 = arith.addf %25, %24 : vector<8x128xf32>
    %27 = arith.divf %25, %26 : vector<8x128xf32>
    %28 = vector.extract_strided_slice %21 {offsets = [0, 128], sizes = [8, 128], strides = [1, 1]} : vector<8x512xf32> to vector<8x128xf32>
    %29 = arith.negf %28 : vector<8x128xf32>
    %30 = math.exp %29 : vector<8x128xf32>
    %cst_16 = arith.constant 1.000000e+00 : f32
    %31 = vector.broadcast %cst_16 : f32 to vector<8x128xf32>
    %32 = arith.addf %31, %30 : vector<8x128xf32>
    %33 = arith.divf %31, %32 : vector<8x128xf32>
    %34 = vector.extract_strided_slice %21 {offsets = [0, 256], sizes = [8, 128], strides = [1, 1]} : vector<8x512xf32> to vector<8x128xf32>
    %35 = math.tanh %34 : vector<8x128xf32>
    %36 = vector.extract_strided_slice %21 {offsets = [0, 384], sizes = [8, 128], strides = [1, 1]} : vector<8x512xf32> to vector<8x128xf32>
    %37 = arith.negf %36 : vector<8x128xf32>
    %38 = math.exp %37 : vector<8x128xf32>
    %cst_17 = arith.constant 1.000000e+00 : f32
    %39 = vector.broadcast %cst_17 : f32 to vector<8x128xf32>
    %40 = arith.addf %39, %38 : vector<8x128xf32>
    %41 = arith.divf %39, %40 : vector<8x128xf32>
    %42 = arith.mulf %33, %11 : vector<8x128xf32>
    %43 = arith.mulf %27, %35 : vector<8x128xf32>
    %44 = arith.addf %42, %43 : vector<8x128xf32>
    %45 = math.tanh %44 : vector<8x128xf32>
    %46 = arith.mulf %41, %45 : vector<8x128xf32>
    %47 = vector.broadcast %15 : i32 to vector<8x1xi32>
    %48 = arith.cmpi sgt, %3, %47 : vector<8x1xi32>
    %c10_i32 = arith.constant 10 : i32
    %49 = arith.cmpi slt, %15, %c10_i32 : i32
    %cst_18 = arith.constant 0.000000e+00 : f32
    %cst_19 = arith.constant 0xFF800000 : f32
    %50 = arith.select %49, %cst_18, %cst_19 : f32
    %51 = arith.truncf %46 : vector<8x128xf32> to vector<8x128xbf16>
    %52 = vector.shape_cast %48 : vector<8x1xi1> to vector<8x1xi1>
    %53 = vector.broadcast %52 : vector<8x1xi1> to vector<8x128xi1>
    %54 = arith.select %53, %51, %10 : vector<8x128xi1>, vector<8x128xbf16>
    %55 = vector.shape_cast %48 : vector<8x1xi1> to vector<8x1xi1>
    %56 = vector.broadcast %55 : vector<8x1xi1> to vector<8x128xi1>
    %57 = arith.select %56, %44, %11 : vector<8x128xi1>, vector<8x128xf32>
    %58 = vector.shape_cast %48 : vector<8x1xi1> to vector<8x1xi1>
    %59 = vector.broadcast %58 : vector<8x1xi1> to vector<8x128xi1>
    %60 = vector.broadcast %50 : f32 to vector<8x128xf32>
    %61 = arith.select %59, %46, %60 : vector<8x128xi1>, vector<8x128xf32>
    %62 = arith.maximumf %9, %61 : vector<8x128xf32>
    %c1_i32 = arith.constant 1 : i32
    %c0_i32_20 = arith.constant 0 : i32
    %63 = arith.cmpi eq, %arg0, %c0_i32_20 : i32
    %c3_i32_21 = arith.constant 3 : i32
    %64 = arith.subi %c3_i32_21, %c1_i32 : i32
    %65 = arith.select %63, %c1_i32, %64 : i32
    %66 = arith.addi %8, %65 : i32
    %c0_22 = arith.constant 0 : index
    %67 = arith.index_cast %65 : i32 to index
    %c0_23 = arith.constant 0 : index
    %c0_24 = arith.constant 0 : index
    %68 = vector.load %arg3[%c0_22, %67, %c0_23, %c0_24] : memref<1x4x8x512xbf16, #tpu.memory_space<vmem>>, vector<1x1x8x512xbf16>
    %69 = vector.shape_cast %68 : vector<1x1x8x512xbf16> to vector<8x512xbf16>
    %70 = arith.extf %69 : vector<8x512xbf16> to vector<8x512xf32>
    %cst_25 = arith.constant dense<0.000000e+00> : vector<8x512xf32>
    %71 = tpu.matmul %54, %4, %cst_25 {dimension_numbers = #tpu.dot_dimension_numbers<[1], [0], [0], [1], [0, 0, 1, 1], [], []>} : vector<8x128xbf16>, vector<128x512xbf16>, vector<8x512xf32> -> vector<8x512xf32>
    %72 = arith.addf %70, %71 : vector<8x512xf32>
    %73 = vector.extract_strided_slice %72 {offsets = [0, 0], sizes = [8, 128], strides = [1, 1]} : vector<8x512xf32> to vector<8x128xf32>
    %74 = arith.negf %73 : vector<8x128xf32>
    %75 = math.exp %74 : vector<8x128xf32>
    %cst_26 = arith.constant 1.000000e+00 : f32
    %76 = vector.broadcast %cst_26 : f32 to vector<8x128xf32>
    %77 = arith.addf %76, %75 : vector<8x128xf32>
    %78 = arith.divf %76, %77 : vector<8x128xf32>
    %79 = vector.extract_strided_slice %72 {offsets = [0, 128], sizes = [8, 128], strides = [1, 1]} : vector<8x512xf32> to vector<8x128xf32>
    %80 = arith.negf %79 : vector<8x128xf32>
    %81 = math.exp %80 : vector<8x128xf32>
    %cst_27 = arith.constant 1.000000e+00 : f32
    %82 = vector.broadcast %cst_27 : f32 to vector<8x128xf32>
    %83 = arith.addf %82, %81 : vector<8x128xf32>
    %84 = arith.divf %82, %83 : vector<8x128xf32>
    %85 = vector.extract_strided_slice %72 {offsets = [0, 256], sizes = [8, 128], strides = [1, 1]} : vector<8x512xf32> to vector<8x128xf32>
    %86 = math.tanh %85 : vector<8x128xf32>
    %87 = vector.extract_strided_slice %72 {offsets = [0, 384], sizes = [8, 128], strides = [1, 1]} : vector<8x512xf32> to vector<8x128xf32>
    %88 = arith.negf %87 : vector<8x128xf32>
    %89 = math.exp %88 : vector<8x128xf32>
    %cst_28 = arith.constant 1.000000e+00 : f32
    %90 = vector.broadcast %cst_28 : f32 to vector<8x128xf32>
    %91 = arith.addf %90, %89 : vector<8x128xf32>
    %92 = arith.divf %90, %91 : vector<8x128xf32>
    %93 = arith.mulf %84, %57 : vector<8x128xf32>
    %94 = arith.mulf %78, %86 : vector<8x128xf32>
    %95 = arith.addf %93, %94 : vector<8x128xf32>
    %96 = math.tanh %95 : vector<8x128xf32>
    %97 = arith.mulf %92, %96 : vector<8x128xf32>
    %98 = vector.broadcast %66 : i32 to vector<8x1xi32>
    %99 = arith.cmpi sgt, %3, %98 : vector<8x1xi32>
    %c10_i32_29 = arith.constant 10 : i32
    %100 = arith.cmpi slt, %66, %c10_i32_29 : i32
    %cst_30 = arith.constant 0.000000e+00 : f32
    %cst_31 = arith.constant 0xFF800000 : f32
    %101 = arith.select %100, %cst_30, %cst_31 : f32
    %102 = arith.truncf %97 : vector<8x128xf32> to vector<8x128xbf16>
    %103 = vector.shape_cast %99 : vector<8x1xi1> to vector<8x1xi1>
    %104 = vector.broadcast %103 : vector<8x1xi1> to vector<8x128xi1>
    %105 = arith.select %104, %102, %54 : vector<8x128xi1>, vector<8x128xbf16>
    %106 = vector.shape_cast %99 : vector<8x1xi1> to vector<8x1xi1>
    %107 = vector.broadcast %106 : vector<8x1xi1> to vector<8x128xi1>
    %108 = arith.select %107, %95, %57 : vector<8x128xi1>, vector<8x128xf32>
    %109 = vector.shape_cast %99 : vector<8x1xi1> to vector<8x1xi1>
    %110 = vector.broadcast %109 : vector<8x1xi1> to vector<8x128xi1>
    %111 = vector.broadcast %101 : f32 to vector<8x128xf32>
    %112 = arith.select %110, %97, %111 : vector<8x128xi1>, vector<8x128xf32>
    %113 = arith.maximumf %62, %112 : vector<8x128xf32>
    %c2_i32_32 = arith.constant 2 : i32
    %c0_i32_33 = arith.constant 0 : i32
    %114 = arith.cmpi eq, %arg0, %c0_i32_33 : i32
    %c3_i32_34 = arith.constant 3 : i32
    %115 = arith.subi %c3_i32_34, %c2_i32_32 : i32
    %116 = arith.select %114, %c2_i32_32, %115 : i32
    %117 = arith.addi %8, %116 : i32
    %c0_35 = arith.constant 0 : index
    %118 = arith.index_cast %116 : i32 to index
    %c0_36 = arith.constant 0 : index
    %c0_37 = arith.constant 0 : index
    %119 = vector.load %arg3[%c0_35, %118, %c0_36, %c0_37] : memref<1x4x8x512xbf16, #tpu.memory_space<vmem>>, vector<1x1x8x512xbf16>
    %120 = vector.shape_cast %119 : vector<1x1x8x512xbf16> to vector<8x512xbf16>
    %121 = arith.extf %120 : vector<8x512xbf16> to vector<8x512xf32>
    %cst_38 = arith.constant dense<0.000000e+00> : vector<8x512xf32>
    %122 = tpu.matmul %105, %4, %cst_38 {dimension_numbers = #tpu.dot_dimension_numbers<[1], [0], [0], [1], [0, 0, 1, 1], [], []>} : vector<8x128xbf16>, vector<128x512xbf16>, vector<8x512xf32> -> vector<8x512xf32>
    %123 = arith.addf %121, %122 : vector<8x512xf32>
    %124 = vector.extract_strided_slice %123 {offsets = [0, 0], sizes = [8, 128], strides = [1, 1]} : vector<8x512xf32> to vector<8x128xf32>
    %125 = arith.negf %124 : vector<8x128xf32>
    %126 = math.exp %125 : vector<8x128xf32>
    %cst_39 = arith.constant 1.000000e+00 : f32
    %127 = vector.broadcast %cst_39 : f32 to vector<8x128xf32>
    %128 = arith.addf %127, %126 : vector<8x128xf32>
    %129 = arith.divf %127, %128 : vector<8x128xf32>
    %130 = vector.extract_strided_slice %123 {offsets = [0, 128], sizes = [8, 128], strides = [1, 1]} : vector<8x512xf32> to vector<8x128xf32>
    %131 = arith.negf %130 : vector<8x128xf32>
    %132 = math.exp %131 : vector<8x128xf32>
    %cst_40 = arith.constant 1.000000e+00 : f32
    %133 = vector.broadcast %cst_40 : f32 to vector<8x128xf32>
    %134 = arith.addf %133, %132 : vector<8x128xf32>
    %135 = arith.divf %133, %134 : vector<8x128xf32>
    %136 = vector.extract_strided_slice %123 {offsets = [0, 256], sizes = [8, 128], strides = [1, 1]} : vector<8x512xf32> to vector<8x128xf32>
    %137 = math.tanh %136 : vector<8x128xf32>
    %138 = vector.extract_strided_slice %123 {offsets = [0, 384], sizes = [8, 128], strides = [1, 1]} : vector<8x512xf32> to vector<8x128xf32>
    %139 = arith.negf %138 : vector<8x128xf32>
    %140 = math.exp %139 : vector<8x128xf32>
    %cst_41 = arith.constant 1.000000e+00 : f32
    %141 = vector.broadcast %cst_41 : f32 to vector<8x128xf32>
    %142 = arith.addf %141, %140 : vector<8x128xf32>
    %143 = arith.divf %141, %142 : vector<8x128xf32>
    %144 = arith.mulf %135, %108 : vector<8x128xf32>
    %145 = arith.mulf %129, %137 : vector<8x128xf32>
    %146 = arith.addf %144, %145 : vector<8x128xf32>
    %147 = math.tanh %146 : vector<8x128xf32>
    %148 = arith.mulf %143, %147 : vector<8x128xf32>
    %149 = vector.broadcast %117 : i32 to vector<8x1xi32>
    %150 = arith.cmpi sgt, %3, %149 : vector<8x1xi32>
    %c10_i32_42 = arith.constant 10 : i32
    %151 = arith.cmpi slt, %117, %c10_i32_42 : i32
    %cst_43 = arith.constant 0.000000e+00 : f32
    %cst_44 = arith.constant 0xFF800000 : f32
    %152 = arith.select %151, %cst_43, %cst_44 : f32
    %153 = arith.truncf %148 : vector<8x128xf32> to vector<8x128xbf16>
    %154 = vector.shape_cast %150 : vector<8x1xi1> to vector<8x1xi1>
    %155 = vector.broadcast %154 : vector<8x1xi1> to vector<8x128xi1>
    %156 = arith.select %155, %153, %105 : vector<8x128xi1>, vector<8x128xbf16>
    %157 = vector.shape_cast %150 : vector<8x1xi1> to vector<8x1xi1>
    %158 = vector.broadcast %157 : vector<8x1xi1> to vector<8x128xi1>
    %159 = arith.select %158, %146, %108 : vector<8x128xi1>, vector<8x128xf32>
    %160 = vector.shape_cast %150 : vector<8x1xi1> to vector<8x1xi1>
    %161 = vector.broadcast %160 : vector<8x1xi1> to vector<8x128xi1>
    %162 = vector.broadcast %152 : f32 to vector<8x128xf32>
    %163 = arith.select %161, %148, %162 : vector<8x128xi1>, vector<8x128xf32>
    %164 = arith.maximumf %113, %163 : vector<8x128xf32>
    %c3_i32_45 = arith.constant 3 : i32
    %c0_i32_46 = arith.constant 0 : i32
    %165 = arith.cmpi eq, %arg0, %c0_i32_46 : i32
    %c3_i32_47 = arith.constant 3 : i32
    %166 = arith.subi %c3_i32_47, %c3_i32_45 : i32
    %167 = arith.select %165, %c3_i32_45, %166 : i32
    %168 = arith.addi %8, %167 : i32
    %c0_48 = arith.constant 0 : index
    %169 = arith.index_cast %167 : i32 to index
    %c0_49 = arith.constant 0 : index
    %c0_50 = arith.constant 0 : index
    %170 = vector.load %arg3[%c0_48, %169, %c0_49, %c0_50] : memref<1x4x8x512xbf16, #tpu.memory_space<vmem>>, vector<1x1x8x512xbf16>
    %171 = vector.shape_cast %170 : vector<1x1x8x512xbf16> to vector<8x512xbf16>
    %172 = arith.extf %171 : vector<8x512xbf16> to vector<8x512xf32>
    %cst_51 = arith.constant dense<0.000000e+00> : vector<8x512xf32>
    %173 = tpu.matmul %156, %4, %cst_51 {dimension_numbers = #tpu.dot_dimension_numbers<[1], [0], [0], [1], [0, 0, 1, 1], [], []>} : vector<8x128xbf16>, vector<128x512xbf16>, vector<8x512xf32> -> vector<8x512xf32>
    %174 = arith.addf %172, %173 : vector<8x512xf32>
    %175 = vector.extract_strided_slice %174 {offsets = [0, 0], sizes = [8, 128], strides = [1, 1]} : vector<8x512xf32> to vector<8x128xf32>
    %176 = arith.negf %175 : vector<8x128xf32>
    %177 = math.exp %176 : vector<8x128xf32>
    %cst_52 = arith.constant 1.000000e+00 : f32
    %178 = vector.broadcast %cst_52 : f32 to vector<8x128xf32>
    %179 = arith.addf %178, %177 : vector<8x128xf32>
    %180 = arith.divf %178, %179 : vector<8x128xf32>
    %181 = vector.extract_strided_slice %174 {offsets = [0, 128], sizes = [8, 128], strides = [1, 1]} : vector<8x512xf32> to vector<8x128xf32>
    %182 = arith.negf %181 : vector<8x128xf32>
    %183 = math.exp %182 : vector<8x128xf32>
    %cst_53 = arith.constant 1.000000e+00 : f32
    %184 = vector.broadcast %cst_53 : f32 to vector<8x128xf32>
    %185 = arith.addf %184, %183 : vector<8x128xf32>
    %186 = arith.divf %184, %185 : vector<8x128xf32>
    %187 = vector.extract_strided_slice %174 {offsets = [0, 256], sizes = [8, 128], strides = [1, 1]} : vector<8x512xf32> to vector<8x128xf32>
    %188 = math.tanh %187 : vector<8x128xf32>
    %189 = vector.extract_strided_slice %174 {offsets = [0, 384], sizes = [8, 128], strides = [1, 1]} : vector<8x512xf32> to vector<8x128xf32>
    %190 = arith.negf %189 : vector<8x128xf32>
    %191 = math.exp %190 : vector<8x128xf32>
    %cst_54 = arith.constant 1.000000e+00 : f32
    %192 = vector.broadcast %cst_54 : f32 to vector<8x128xf32>
    %193 = arith.addf %192, %191 : vector<8x128xf32>
    %194 = arith.divf %192, %193 : vector<8x128xf32>
    %195 = arith.mulf %186, %159 : vector<8x128xf32>
    %196 = arith.mulf %180, %188 : vector<8x128xf32>
    %197 = arith.addf %195, %196 : vector<8x128xf32>
    %198 = math.tanh %197 : vector<8x128xf32>
    %199 = arith.mulf %194, %198 : vector<8x128xf32>
    %200 = vector.broadcast %168 : i32 to vector<8x1xi32>
    %201 = arith.cmpi sgt, %3, %200 : vector<8x1xi32>
    %c10_i32_55 = arith.constant 10 : i32
    %202 = arith.cmpi slt, %168, %c10_i32_55 : i32
    %cst_56 = arith.constant 0.000000e+00 : f32
    %cst_57 = arith.constant 0xFF800000 : f32
    %203 = arith.select %202, %cst_56, %cst_57 : f32
    %204 = arith.truncf %199 : vector<8x128xf32> to vector<8x128xbf16>
    %205 = vector.shape_cast %201 : vector<8x1xi1> to vector<8x1xi1>
    %206 = vector.broadcast %205 : vector<8x1xi1> to vector<8x128xi1>
    %207 = arith.select %206, %204, %156 : vector<8x128xi1>, vector<8x128xbf16>
    %208 = vector.shape_cast %201 : vector<8x1xi1> to vector<8x1xi1>
    %209 = vector.broadcast %208 : vector<8x1xi1> to vector<8x128xi1>
    %210 = arith.select %209, %197, %159 : vector<8x128xi1>, vector<8x128xf32>
    %211 = vector.shape_cast %201 : vector<8x1xi1> to vector<8x1xi1>
    %212 = vector.broadcast %211 : vector<8x1xi1> to vector<8x128xi1>
    %213 = vector.broadcast %203 : f32 to vector<8x128xf32>
    %214 = arith.select %212, %199, %213 : vector<8x128xi1>, vector<8x128xf32>
    %215 = arith.maximumf %164, %214 : vector<8x128xf32>
    %c4_i32_58 = arith.constant 4 : i32
    %c0_59 = arith.constant 0 : index
    %c0_60 = arith.constant 0 : index
    %216 = vector.load %arg8[%c0_59, %c0_60] : memref<8x128xbf16, #tpu.memory_space<vmem>>, vector<8x128xbf16>
    tpu.vector_store %arg8[%c0_59, %c0_60], %207 {strides = array<i32>} : memref<8x128xbf16, #tpu.memory_space<vmem>>, vector<8x128xbf16>,
    %c0_61 = arith.constant 0 : index
    %c0_62 = arith.constant 0 : index
    %217 = vector.load %arg9[%c0_61, %c0_62] : memref<8x128xf32, #tpu.memory_space<vmem>>, vector<8x128xf32>
    tpu.vector_store %arg9[%c0_61, %c0_62], %210 {strides = array<i32>} : memref<8x128xf32, #tpu.memory_space<vmem>>, vector<8x128xf32>,
    %c0_i32_63 = arith.constant 0 : i32
    %218 = arith.cmpi eq, %arg1, %c0_i32_63 : i32
    %219 = arith.extui %218 : i1 to i32
    %c0_i32_64 = arith.constant 0 : i32
    %220 = arith.cmpi ne, %219, %c0_i32_64 : i32
    scf.if %220 {
      %c0_67 = arith.constant 0 : index
      %c0_68 = arith.constant 0 : index
      %c0_69 = arith.constant 0 : index
      %224 = vector.load %arg5[%c0_67, %c0_68, %c0_69] : memref<1x8x128xf32, #tpu.memory_space<vmem>>, vector<1x8x128xf32>
      %225 = vector.shape_cast %224 : vector<1x8x128xf32> to vector<8x128xf32>
      %226 = vector.shape_cast %215 : vector<8x128xf32> to vector<1x8x128xf32>
      tpu.vector_store %arg5[%c0_67, %c0_68, %c0_69], %226 {strides = array<i32>} : memref<1x8x128xf32, #tpu.memory_space<vmem>>, vector<1x8x128xf32>,
    } else {
    }
    %c0_i32_65 = arith.constant 0 : i32
    %221 = arith.cmpi sgt, %arg1, %c0_i32_65 : i32
    %222 = arith.extui %221 : i1 to i32
    %c0_i32_66 = arith.constant 0 : i32
    %223 = arith.cmpi ne, %222, %c0_i32_66 : i32
    scf.if %223 {
      %c0_67 = arith.constant 0 : index
      %c0_68 = arith.constant 0 : index
      %c0_69 = arith.constant 0 : index
      %224 = vector.load %arg5[%c0_67, %c0_68, %c0_69] : memref<1x8x128xf32, #tpu.memory_space<vmem>>, vector<1x8x128xf32>
      %225 = vector.shape_cast %224 : vector<1x8x128xf32> to vector<8x128xf32>
      %226 = arith.maximumf %225, %215 : vector<8x128xf32>
      %c0_70 = arith.constant 0 : index
      %c0_71 = arith.constant 0 : index
      %c0_72 = arith.constant 0 : index
      %227 = vector.load %arg5[%c0_70, %c0_71, %c0_72] : memref<1x8x128xf32, #tpu.memory_space<vmem>>, vector<1x8x128xf32>
      %228 = vector.shape_cast %227 : vector<1x8x128xf32> to vector<8x128xf32>
      %229 = vector.shape_cast %226 : vector<8x128xf32> to vector<1x8x128xf32>
      tpu.vector_store %arg5[%c0_70, %c0_71, %c0_72], %229 {strides = array<i32>} : memref<1x8x128xf32, #tpu.memory_space<vmem>>, vector<1x8x128xf32>,
    } else {
    }
    return
  }
  func.func @transform_0(%arg0: i32, %arg1: i32) -> (i32, i32) {
    %c0_i32 = arith.constant 0 : i32
    %c0_i32_0 = arith.constant 0 : i32
    %c0_i32_1 = arith.constant 0 : i32
    return %c0_i32, %c0_i32_0 : i32, i32
  }
  func.func @transform_1(%arg0: i32, %arg1: i32) -> (i32, i32, i32, i32) {
    %c0_i32 = arith.constant 0 : i32
    %0 = arith.cmpi eq, %arg0, %c0_i32 : i32
    %c2_i32 = arith.constant 2 : i32
    %1 = arith.subi %c2_i32, %arg1 : i32
    %2 = arith.select %0, %arg1, %1 : i32
    %c0_i32_0 = arith.constant 0 : i32
    %c0_i32_1 = arith.constant 0 : i32
    %c0_i32_2 = arith.constant 0 : i32
    return %arg0, %2, %c0_i32_0, %c0_i32_1 : i32, i32, i32, i32
  }
  func.func @transform_3(%arg0: i32, %arg1: i32) -> (i32, i32, i32) {
    %c0_i32 = arith.constant 0 : i32
    %c0_i32_0 = arith.constant 0 : i32
    %c0_i32_1 = arith.constant 0 : i32
    return %arg0, %c0_i32, %c0_i32_0 : i32, i32, i32
  }
}

</mosaic_0001>

<llo_original>
// kernel: blstm_encoder_forward.2
$region0: #{blstm_encoder_forward.2}
  #allocation0 [shape = 'u32[]', space=smem, size = 0x4, offset = 0x4, fixed_abs, tag = 'smem constant byte address 0x4 - core index']
  #allocation1 [shape = 'u32[144,128]{1,0:T(1,128)}', space=vmem, size = 0x12000, scoped, tag = 'internal scratch']
  %s0 = inlined_call_operand.vmem [shape: bf16[96,64], index: 0, kind: input, shape index: {}]
  %s1 = inlined_call_operand.vmem [shape: bf16[2,64,512], index: 1, kind: input, shape index: {}]
  %s2 = inlined_call_operand.hbm [shape: f32[2,1,512], index: 2, kind: input, shape index: {}]
  %s3 = inlined_call_operand.vmem [shape: bf16[2,96,512], index: 3, kind: output, shape index: {}]
  %s4 = sld [smem:[#allocation0]]
  $region49: #{blstm_encoder_forward.2} parent=0
    _
  %s6 = ssub.s32 1, %s4
  %s7 = scalar_select 0, %s6, %s4
  $region1: #{blstm_encoder_forward.2} parent=0
    #allocation2 [shape = 'u8[4096]{0}', space=vmem, size = 0x1000, scoped, tag = 'input window, operand 2']
    #allocation3 [shape = 's32[2]{0}', space=sflag, size = 0x8, scoped, tag = 'scoped memory for blstm_encoder_forward.2']
    %8 = vsyncpa [#allocation3], 0
    %s9 = scalar_lea.sflag [#allocation3], 1
    %10 = vsyncpa %s9, 0
    loop: start=0, step=1, limit=8
    $region2: #{blstm_encoder_forward.2} parent=1 // loop_pre_header
      _
    $region3: #{blstm_encoder_forward.2} parent=1 // loop_header
      %s12 = sphi 0, %s16
      %p13 = scmp.ge.s32.totalorder %s12, 8
      %s19 = sphi 0, %s31
      %s20 = sphi 0, %s27
      %s21 = sphi 0, %s19
      %s22 = sphi 0, %s20
      %s23 = sphi 0, %s21
      %s24 = sphi 0, %s22
      %s34 = sphi 0, %s36
      %s37 = sphi 0, %s34
      %s38 = sphi 0, %s37
      %s54 = sphi 0, %s38
      %s60 = sphi 0, %s62
      %s63 = sphi 0, %s60
      %s64 = sphi 0, %s63
      %s80 = sphi 0, %s64
      %s86 = sphi 0, %s88
      %s89 = sphi 0, %s86
      %s90 = sphi 0, %s89
      %s106 = sphi 0, %s90
      %s114 = sphi 0, %s116
      %s117 = sphi 0, %s114
      %s118 = sphi 0, %s117
      %s134 = sphi 0, %s118
    $region4: #{blstm_encoder_forward.2} parent=1 // loop_header_branch
      %15 = sbr.rel (%p13) target = $region8
    $region5: #{blstm_encoder_forward.2} parent=1 // loop_body
      %s17 = ssub.s32 %s12, 1
      %s18 = ssub.s32 %s12, 2
      %s25 = sadd.s32 1, %s20
      %p26 = scmp.ge.s32.totalorder %s25, 3
      %s27 = scalar_select %p26, 0, %s25
      %s28 = sadd.s32 1, %s19
      %s29 = scalar_select %p26, %s28, %s19
      %p30 = scmp.ge.s32.totalorder %s29, 2
      %s31 = scalar_select %p30, 0, %s29
      %s32 = ssub.s32 %s20, %s27
      %p33 = scmp.eq.s32.totalorder %s32, 0
      %s35 = sadd.s32 %s34, 1
      %s36 = scalar_select %p33, %s34, %s35
      %p39 = pneg %p33
      %p40 = scmp.eq.s32.totalorder %s12, 5
      %p41 = por %p39, %p40
      %p42 = scmp.ne.s32.totalorder %s34, %s37
      %p43 = scmp.eq.s32.totalorder %s12, 0
      %p44 = por %p42, %p43
      %p45 = scmp.ne.s32.totalorder %s34, %s37
      %p46 = scmp.eq.s32.totalorder %s17, 5
      %p47 = por %p45, %p46
      %p48 = scmp.ne.s32.totalorder %s37, %s38
      %p49 = scmp.eq.s32.totalorder %s17, 0
      %p50 = por %p48, %p49
      %p51 = scmp.ne.s32.totalorder %s37, %s38
      %p52 = scmp.eq.s32.totalorder %s18, 5
      %p53 = por %p51, %p52
      %p55 = scmp.ne.s32.totalorder %s38, %s54
      %p56 = scmp.eq.s32.totalorder %s18, 0
      %p57 = por %p55, %p56
      %s58 = ssub.s32 %s19, %s31
      %p59 = scmp.eq.s32.totalorder %s58, 0
      %s61 = sadd.s32 %s60, 1
      %s62 = scalar_select %p59, %s60, %s61
      %p65 = pneg %p59
      %p66 = scmp.eq.s32.totalorder %s12, 5
      %p67 = por %p65, %p66
      %p68 = scmp.ne.s32.totalorder %s60, %s63
      %p69 = scmp.eq.s32.totalorder %s12, 0
      %p70 = por %p68, %p69
      %p71 = scmp.ne.s32.totalorder %s60, %s63
      %p72 = scmp.eq.s32.totalorder %s17, 5
      %p73 = por %p71, %p72
      %p74 = scmp.ne.s32.totalorder %s63, %s64
      %p75 = scmp.eq.s32.totalorder %s17, 0
      %p76 = por %p74, %p75
      %p77 = scmp.ne.s32.totalorder %s63, %s64
      %p78 = scmp.eq.s32.totalorder %s18, 5
      %p79 = por %p77, %p78
      %p81 = scmp.ne.s32.totalorder %s64, %s80
      %p82 = scmp.eq.s32.totalorder %s18, 0
      %p83 = por %p81, %p82
      %s84 = ssub.s32 %s19, %s31
      %p85 = scmp.eq.s32.totalorder %s84, 0
      %s87 = sadd.s32 %s86, 1
      %s88 = scalar_select %p85, %s86, %s87
      %p91 = pneg %p85
      %p92 = scmp.eq.s32.totalorder %s12, 5
      %p93 = por %p91, %p92
      %p94 = scmp.ne.s32.totalorder %s86, %s89
      %p95 = scmp.eq.s32.totalorder %s12, 0
      %p96 = por %p94, %p95
      %p97 = scmp.ne.s32.totalorder %s86, %s89
      %p98 = scmp.eq.s32.totalorder %s17, 5
      %p99 = por %p97, %p98
      %p100 = scmp.ne.s32.totalorder %s89, %s90
      %p101 = scmp.eq.s32.totalorder %s17, 0
      %p102 = por %p100, %p101
      %p103 = scmp.ne.s32.totalorder %s89, %s90
      %p104 = scmp.eq.s32.totalorder %s18, 5
      %p105 = por %p103, %p104
      %p107 = scmp.ne.s32.totalorder %s90, %s106
      %p108 = scmp.eq.s32.totalorder %s18, 0
      %p109 = por %p107, %p108
      %s110 = ssub.s32 %s19, %s31
      %s111 = ssub.s32 %s20, %s27
      %s112 = sor.u32 %s110, %s111
      %p113 = scmp.eq.s32.totalorder %s112, 0
      %s115 = sadd.s32 %s114, 1
      %s116 = scalar_select %p113, %s114, %s115
      %p119 = pneg %p113
      %p120 = scmp.eq.s32.totalorder %s12, 5
      %p121 = por %p119, %p120
      %p122 = scmp.ne.s32.totalorder %s114, %s117
      %p123 = scmp.eq.s32.totalorder %s12, 0
      %p124 = por %p122, %p123
      %p125 = scmp.ne.s32.totalorder %s114, %s117
      %p126 = scmp.eq.s32.totalorder %s17, 5
      %p127 = por %p125, %p126
      %p128 = scmp.ne.s32.totalorder %s117, %s118
      %p129 = scmp.eq.s32.totalorder %s17, 0
      %p130 = por %p128, %p129
      %p131 = scmp.ne.s32.totalorder %s117, %s118
      %p132 = scmp.eq.s32.totalorder %s18, 5
      %p133 = por %p131, %p132
      %p135 = scmp.ne.s32.totalorder %s118, %s134
      %p136 = scmp.eq.s32.totalorder %s18, 0
      %p137 = por %p135, %p136
      %p138 = scmp.le.s32.totalorder 1, %s12
      %p139 = scmp.lt.s32.totalorder %s12, 7
      %p140 = pnand %p138, %p139
      %p141 = pneg %p140
      // Predicated region
      $region9: #{blstm_encoder_forward.2} parent=5 // pred_check
        _
      $region10: #{blstm_encoder_forward.2} parent=5 // pred_check_branch
        %143 = sbr.rel (%p140) target = $region12
      $region11: #{blstm_encoder_forward.2} parent=5 // pred_region
        %s144 = ssub.s32 %s12, 1
      $region12: #{blstm_encoder_forward.2} parent=5 // pred_fallthru
        _
      %p145 = scmp.lt.s32.totalorder %s12, 6
      // Predicated region
      $region13: #{blstm_encoder_forward.2} parent=5 // pred_check
        %p146 = pneg %p145
      $region14: #{blstm_encoder_forward.2} parent=5 // pred_check_branch
        %148 = sbr.rel (%p146) target = $region16
      $region15: #{blstm_encoder_forward.2} parent=5 // pred_region
        // Predicated region
        $region17: #{blstm_encoder_forward.2} parent=15 // pred_check
          %p149 = pneg %p44
        $region18: #{blstm_encoder_forward.2} parent=15 // pred_check_branch
          %151 = sbr.rel (%p149) target = $region20
        $region19: #{blstm_encoder_forward.2} parent=15 // pred_region
          %s152 = smul.u32 4, %s20
          %p153 = scmp.lt.s32.totalorder %s152, 11
          %s154 = scalar_select %p153, %s152, 11
          %s155 = smul.addr %s154, 4
          %s156 = scalar_lea.vmem %s0, %s155
          %s157 = smul.u32 4, %s20
        $region20: #{blstm_encoder_forward.2} parent=15 // pred_fallthru
          _
        // Predicated region
        $region21: #{blstm_encoder_forward.2} parent=15 // pred_check
          %p158 = pneg %p70
        $region22: #{blstm_encoder_forward.2} parent=15 // pred_check_branch
          %160 = sbr.rel (%p158) target = $region24
        $region23: #{blstm_encoder_forward.2} parent=15 // pred_region
          %p161 = scmp.lt.s32.totalorder %s19, 1
          %s162 = scalar_select %p161, %s19, 1
          %s163 = smul.addr %s162, 32
          %s164 = smul.addr %s163, 4
          %s165 = scalar_lea.vmem %s1, %s164
        $region24: #{blstm_encoder_forward.2} parent=15 // pred_fallthru
          _
        // Predicated region
        $region25: #{blstm_encoder_forward.2} parent=15 // pred_check
          %p166 = pneg %p96
        $region26: #{blstm_encoder_forward.2} parent=15 // pred_check_branch
          %168 = sbr.rel (%p166) target = $region28
        $region27: #{blstm_encoder_forward.2} parent=15 // pred_region
          %s169 = sand.u32 %s86, 1
          %s170 = scalar_lea.sflag [#allocation3], %s169
          %s171 = sand.u32 %s86, 1
          %s172 = smul.addr %s171, 4
          %s173 = scalar_lea.vmem [#allocation2], %s172
          %s175 = ssub.s32 64, 64
          %176 = vsyncadd %s170, %s175
          %s177 = smul.addr %s19, 4
          %s178 = smul.addr %s177, 16
          %s179 = scalar_lea.hbm %s2, %s178
          %s181 = sshll.u32 %s173, 4
          %s182 = int_to_ptr.vmem [resolvable:$true] %s181
          %184 = dma.hbm_to_vmem [thread:$0]  %s179, 64, %s182, %s170
        $region28: #{blstm_encoder_forward.2} parent=15 // pred_fallthru
          _
      $region16: #{blstm_encoder_forward.2} parent=5 // pred_fallthru
        _
      %p185 = scmp.le.s32.totalorder 1, %s12
      %p186 = scmp.lt.s32.totalorder %s12, 7
      %p187 = pnand %p185, %p186
      %p188 = pneg %p187
      // Predicated region
      $region29: #{blstm_encoder_forward.2} parent=5 // pred_check
        _
      $region30: #{blstm_encoder_forward.2} parent=5 // pred_check_branch
        %190 = sbr.rel (%p187) target = $region32
      $region31: #{blstm_encoder_forward.2} parent=5 // pred_region
        %s191 = ssub.s32 %s12, 1
        %s192 = sand.u32 %s89, 1
        %s193 = scalar_lea.sflag [#allocation3], %s192
        %s194 = sand.u32 %s89, 1
        %s195 = smul.addr %s194, 4
        %s196 = scalar_lea.vmem [#allocation2], %s195
        // Predicated region
        $region33: #{blstm_encoder_forward.2} parent=31 // pred_check
          %p197 = pneg %p102
        $region34: #{blstm_encoder_forward.2} parent=31 // pred_check_branch
          %199 = sbr.rel (%p197) target = $region36
        $region35: #{blstm_encoder_forward.2} parent=31 // pred_region
          %200 = dma.done %s193, 64
        $region36: #{blstm_encoder_forward.2} parent=31 // pred_fallthru
          _
        %s201 = smul.u32 4, %s22
        %p202 = scmp.lt.s32.totalorder %s201, 11
        %s203 = scalar_select %p202, %s201, 11
        %s204 = smul.addr %s203, 4
        %s205 = scalar_lea.vmem %s0, %s204
        %p206 = pneg %p50
        %p207 = pneg %p47
        %p208 = scmp.lt.s32.totalorder %s21, 1
        %s209 = scalar_select %p208, %s21, 1
        %s210 = smul.addr %s209, 32
        %s211 = smul.addr %s210, 4
        %s212 = scalar_lea.vmem %s1, %s211
        %p213 = pneg %p76
        %p214 = pneg %p73
        %s215 = sand.u32 %s89, 1
        %s216 = scalar_lea.sflag [#allocation3], %s215
        %s217 = sand.u32 %s89, 1
        %s218 = smul.addr %s217, 4
        %s219 = scalar_lea.vmem [#allocation2], %s218
        %p220 = pneg %p102
        %p221 = pneg %p99
        %p222 = pneg %p130
        %p223 = pneg %p127
        %s224 = smul.u32 4, %s22
        %p225 = scmp.lt.s32.totalorder %s21, 1
        %s226 = scalar_select %p225, %s21, 1
        %p227 = scmp.lt.s32.totalorder %s224, 11
        %s228 = scalar_select %p227, %s224, 11
        %s229 = smul.addr %s228, 4
        %s230 = smul.addr %s226, 48
        %s231 = sadd.s32 %s229, %s230
        %s232 = smul.addr %s231, 4
        %s233 = scalar_lea.vmem %s3, %s232
        %s234 = smul.u32 4, %s22
        %p235 = scmp.lt.s32.totalorder %s234, 11
        %s236 = scalar_select %p235, %s234, 11
        %s237 = smul.addr %s236, 4
        %s238 = scalar_lea.vmem %s0, %s237
        %s239 = smul.u32 4, %s22
        %p240 = scmp.lt.s32.totalorder %s21, 1
        %s241 = scalar_select %p240, %s21, 1
        %s242 = smul.addr %s241, 32
        %s243 = smul.addr %s242, 4
        %s244 = scalar_lea.vmem %s1, %s243
        %s245 = smul.u32 4, %s22
        %p246 = scmp.lt.s32.totalorder %s21, 1
        %s247 = scalar_select %p246, %s21, 1
        %p248 = scmp.lt.s32.totalorder %s245, 11
        %s249 = scalar_select %p248, %s245, 11
        %s250 = smul.addr %s249, 4
        %s251 = smul.addr %s247, 48
        %s252 = sadd.s32 %s250, %s251
        %s253 = smul.addr %s252, 4
        %s254 = scalar_lea.vmem %s3, %s253
        %s255 = smul.u32 4, %s22
        %v257 = vld [vmem:[%s238] sm:$0xf]
        %v258 = vld [vmem:[%s238 + $0x4] sm:$0xf]
        %v259 = vld [vmem:[%s238 + $0x8] sm:$0xf]
        %v260 = vld [vmem:[%s238 + $0xc] sm:$0xf]
        %v261 = vld [vmem:[%s244] sm:$0xff]
        %v262 = vld [vmem:[%s244 + $0x8] sm:$0xff]
        %v263 = vld [vmem:[%s244 + $0x10] sm:$0xff]
        %v264 = vld [vmem:[%s244 + $0x18] sm:$0xff]
        %v265 = vld [vmem:[%s244 + $0x20] sm:$0xff]
        %v266 = vld [vmem:[%s244 + $0x28] sm:$0xff]
        %v267 = vld [vmem:[%s244 + $0x30] sm:$0xff]
        %v268 = vld [vmem:[%s244 + $0x38] sm:$0xff]
        %v269 = vld [vmem:[%s244 + $0x40] sm:$0xff]
        %v270 = vld [vmem:[%s244 + $0x48] sm:$0xff]
        %v271 = vld [vmem:[%s244 + $0x50] sm:$0xff]
        %v272 = vld [vmem:[%s244 + $0x58] sm:$0xff]
        %v273 = vld [vmem:[%s244 + $0x60] sm:$0xff]
        %v274 = vld [vmem:[%s244 + $0x68] sm:$0xff]
        %v275 = vld [vmem:[%s244 + $0x70] sm:$0xff]
        %v276 = vld [vmem:[%s244 + $0x78] sm:$0xff]
        %v277 = vld [vmem:[%s196] sm:$0xf]
        %v279 = vlaneseq
        %v280 = vshrl.u32 %v279, 7
        %v281 = vsub.s32 0, %v280
        %v282 = vrot.slane %v277, %v281
        %v283 = vlaneseq
        %v284 = vshrl.u32 %v283, 7
        %v285 = vsub.s32 1, %v284
        %v286 = vrot.slane %v277, %v285
        %v287 = vlaneseq
        %v288 = vshrl.u32 %v287, 7
        %v289 = vsub.s32 2, %v288
        %v290 = vrot.slane %v277, %v289
        %v291 = vlaneseq
        %v292 = vshrl.u32 %v291, 7
        %v293 = vsub.s32 3, %v292
        %v294 = vrot.slane %v277, %v293
        %v303 = vunpack.c.l.b16 %v257
        %v304 = vunpack.c.l.b16 %v258
        %v305 = vunpack.c.l.b16 %v259
        %v306 = vunpack.c.l.b16 %v260
        %v307 = vpack.c.b16 %v304, %v303
        %v308 = vpack.c.b16 %v306, %v305
        %v325 = vunpack.c.l.b16 %v261
        %v326 = vunpack.c.h.b16 %v261
        %v327 = vunpack.c.l.b16 %v262
        %v328 = vunpack.c.h.b16 %v262
        %v329 = vunpack.c.l.b16 %v263
        %v330 = vunpack.c.h.b16 %v263
        %v331 = vunpack.c.l.b16 %v264
        %v332 = vunpack.c.h.b16 %v264
        %v333 = vunpack.c.l.b16 %v265
        %v334 = vunpack.c.h.b16 %v265
        %v335 = vunpack.c.l.b16 %v266
        %v336 = vunpack.c.h.b16 %v266
        %v337 = vunpack.c.l.b16 %v267
        %v338 = vunpack.c.h.b16 %v267
        %v339 = vunpack.c.l.b16 %v268
        %v340 = vunpack.c.h.b16 %v268
        %v341 = vunpack.c.l.b16 %v269
        %v342 = vunpack.c.h.b16 %v269
        %v343 = vunpack.c.l.b16 %v270
        %v344 = vunpack.c.h.b16 %v270
        %v345 = vunpack.c.l.b16 %v271
        %v346 = vunpack.c.h.b16 %v271
        %v347 = vunpack.c.l.b16 %v272
        %v348 = vunpack.c.h.b16 %v272
        %v349 = vunpack.c.l.b16 %v273
        %v350 = vunpack.c.h.b16 %v273
        %v351 = vunpack.c.l.b16 %v274
        %v352 = vunpack.c.h.b16 %v274
        %v353 = vunpack.c.l.b16 %v275
        %v354 = vunpack.c.h.b16 %v275
        %v355 = vunpack.c.l.b16 %v276
        %v356 = vunpack.c.h.b16 %v276
        %v357 = vpack.c.b16 %v329, %v325
        %v358 = vpack.c.b16 %v330, %v326
        %v359 = vpack.c.b16 %v331, %v327
        %v360 = vpack.c.b16 %v332, %v328
        %v361 = vpack.c.b16 %v337, %v333
        %v362 = vpack.c.b16 %v338, %v334
        %v363 = vpack.c.b16 %v339, %v335
        %v364 = vpack.c.b16 %v340, %v336
        %v365 = vpack.c.b16 %v345, %v341
        %v366 = vpack.c.b16 %v346, %v342
        %v367 = vpack.c.b16 %v347, %v343
        %v368 = vpack.c.b16 %v348, %v344
        %v369 = vpack.c.b16 %v353, %v349
        %v370 = vpack.c.b16 %v354, %v350
        %v371 = vpack.c.b16 %v355, %v351
        %v372 = vpack.c.b16 %v356, %v352
        %vm389 = vcmask 523264
        %v391 = vsel %vm389, %v307, 0
        %v394 = vsel %vm389, %v308, 0
        %396 = vmatprep.subr.bf16.mxu0 0
        %397 = vmatpush1.bf16.msra.mxu0 0
        %398 = vmatprep.subr.bf16.mxu0 0
        %399 = vmatpush1.bf16.msra.mxu0 0
        %400 = vmatprep.subr.bf16.mxu0 0
        %401 = vmatpush1.bf16.msra.mxu0 0
        %402 = vmatprep.subr.bf16.mxu0 0
        %403 = vmatpush1.bf16.msra.mxu0 0
        %404 = vmatprep.subr.bf16.mxu0 %v370
        %405 = vmatpush1.bf16.msra.mxu0 %v369
        %406 = vmatprep.subr.bf16.mxu0 %v366
        %407 = vmatpush1.bf16.msra.mxu0 %v365
        %408 = vmatprep.subr.bf16.mxu0 %v362
        %409 = vmatpush1.bf16.msra.mxu0 %v361
        %410 = vmatprep.subr.bf16.mxu0 %v358
        %411 = vmatpush1.bf16.msra.mxu0 %v357
        %412 = vmatprep.subr.bf16.mxu0 0
        %413 = vmatpush2.bf16.msra.mxu0 0
        %414 = vmatprep.subr.bf16.mxu0 0
        %415 = vmatpush2.bf16.msra.mxu0 0
        %416 = vmatprep.subr.bf16.mxu0 0
        %417 = vmatpush2.bf16.msra.mxu0 0
        %418 = vmatprep.subr.bf16.mxu0 0
        %419 = vmatpush2.bf16.msra.mxu0 0
        %420 = vmatprep.subr.bf16.mxu0 0
        %421 = vmatpush2.bf16.msra.mxu0 0
        %422 = vmatprep.subr.bf16.mxu0 0
        %423 = vmatpush2.bf16.msra.mxu0 0
        %424 = vmatprep.subr.bf16.mxu0 0
        %425 = vmatpush2.bf16.msra.mxu0 0
        %426 = vmatprep.subr.bf16.mxu0 0
        %427 = vmatpush2.bf16.msra.mxu0 0
        %428 = vmatprep.mubr.bf16.mxu0 0
        %429 = vmatmul.mubr.bf16.gmra.mxu0 %v391
        %v430 = vpop.f32.mrf.mxu0
        %v431 = vadd.f32 %v282, %v430
        %v432 = vpop.f32.mrf.mxu0
        %v433 = vadd.f32 %v286, %v432
        %v434 = vpop.f32.mrf.mxu0
        %v435 = vadd.f32 %v282, %v434
        %v436 = vpop.f32.mrf.mxu0
        %v437 = vadd.f32 %v286, %v436
        %438 = vmatprep.mubr.bf16.mxu0 0
        %439 = vmatmul.mubr.bf16.gmra.mxu0 %v394
        %v440 = vpop.f32.mrf.mxu0
        %v441 = vadd.f32 %v282, %v440
        %v442 = vpop.f32.mrf.mxu0
        %v443 = vadd.f32 %v286, %v442
        %v444 = vpop.f32.mrf.mxu0
        %v445 = vadd.f32 %v282, %v444
        %v446 = vpop.f32.mrf.mxu0
        %v447 = vadd.f32 %v286, %v446
        %448 = vdwg.mxu0
        %449 = vmatprep.subr.bf16.mxu0 0
        %450 = vmatpush1.bf16.msra.mxu0 0
        %451 = vmatprep.subr.bf16.mxu0 0
        %452 = vmatpush1.bf16.msra.mxu0 0
        %453 = vmatprep.subr.bf16.mxu0 0
        %454 = vmatpush1.bf16.msra.mxu0 0
        %455 = vmatprep.subr.bf16.mxu0 0
        %456 = vmatpush1.bf16.msra.mxu0 0
        %457 = vmatprep.subr.bf16.mxu0 %v372
        %458 = vmatpush1.bf16.msra.mxu0 %v371
        %459 = vmatprep.subr.bf16.mxu0 %v368
        %460 = vmatpush1.bf16.msra.mxu0 %v367
        %461 = vmatprep.subr.bf16.mxu0 %v364
        %462 = vmatpush1.bf16.msra.mxu0 %v363
        %463 = vmatprep.subr.bf16.mxu0 %v360
        %464 = vmatpush1.bf16.msra.mxu0 %v359
        %465 = vmatprep.subr.bf16.mxu0 0
        %466 = vmatpush2.bf16.msra.mxu0 0
        %467 = vmatprep.subr.bf16.mxu0 0
        %468 = vmatpush2.bf16.msra.mxu0 0
        %469 = vmatprep.subr.bf16.mxu0 0
        %470 = vmatpush2.bf16.msra.mxu0 0
        %471 = vmatprep.subr.bf16.mxu0 0
        %472 = vmatpush2.bf16.msra.mxu0 0
        %473 = vmatprep.subr.bf16.mxu0 0
        %474 = vmatpush2.bf16.msra.mxu0 0
        %475 = vmatprep.subr.bf16.mxu0 0
        %476 = vmatpush2.bf16.msra.mxu0 0
        %477 = vmatprep.subr.bf16.mxu0 0
        %478 = vmatpush2.bf16.msra.mxu0 0
        %479 = vmatprep.subr.bf16.mxu0 0
        %480 = vmatpush2.bf16.msra.mxu0 0
        %481 = vmatprep.mubr.bf16.mxu0 0
        %482 = vmatmul.mubr.bf16.gmra.mxu0 %v391
        %v483 = vpop.f32.mrf.mxu0
        %v484 = vadd.f32 %v290, %v483
        %v485 = vpop.f32.mrf.mxu0
        %v486 = vadd.f32 %v294, %v485
        %v487 = vpop.f32.mrf.mxu0
        %v488 = vadd.f32 %v290, %v487
        %v489 = vpop.f32.mrf.mxu0
        %v490 = vadd.f32 %v294, %v489
        %491 = vmatprep.mubr.bf16.mxu0 0
        %492 = vmatmul.mubr.bf16.gmra.mxu0 %v394
        %v493 = vpop.f32.mrf.mxu0
        %v494 = vadd.f32 %v290, %v493
        %v495 = vpop.f32.mrf.mxu0
        %v496 = vadd.f32 %v294, %v495
        %v497 = vpop.f32.mrf.mxu0
        %v498 = vadd.f32 %v290, %v497
        %v499 = vpop.f32.mrf.mxu0
        %v500 = vadd.f32 %v294, %v499
        %501 = vdwg.mxu0
        %v502 = vpack.c.bf16 %v435, %v431
        %v503 = vpack.c.bf16 %v437, %v433
        %v504 = vpack.c.bf16 %v488, %v484
        %v505 = vpack.c.bf16 %v490, %v486
        %v506 = vpack.c.bf16 %v445, %v441
        %v507 = vpack.c.bf16 %v447, %v443
        %v508 = vpack.c.bf16 %v498, %v494
        %v509 = vpack.c.bf16 %v500, %v496
        %v518 = vunpack.c.l.b16 %v502
        %v519 = vunpack.c.l.b16 %v503
        %v520 = vunpack.c.l.b16 %v504
        %v521 = vunpack.c.l.b16 %v505
        %v522 = vunpack.c.h.b16 %v502
        %v523 = vunpack.c.h.b16 %v503
        %v524 = vunpack.c.h.b16 %v504
        %v525 = vunpack.c.h.b16 %v505
        %v526 = vunpack.c.l.b16 %v506
        %v527 = vunpack.c.l.b16 %v507
        %v528 = vunpack.c.l.b16 %v508
        %v529 = vunpack.c.l.b16 %v509
        %v530 = vunpack.c.h.b16 %v506
        %v531 = vunpack.c.h.b16 %v507
        %v532 = vunpack.c.h.b16 %v508
        %v533 = vunpack.c.h.b16 %v509
        %v534 = vpack.c.b16 %v519, %v518
        %v535 = vpack.c.b16 %v521, %v520
        %v536 = vpack.c.b16 %v523, %v522
        %v537 = vpack.c.b16 %v525, %v524
        %v538 = vpack.c.b16 %v527, %v526
        %v539 = vpack.c.b16 %v529, %v528
        %v540 = vpack.c.b16 %v531, %v530
        %v541 = vpack.c.b16 %v533, %v532
        %550 = vst [vmem:[%s254] sm:$0xff] %v534
        %551 = vst [vmem:[%s254 + $0x8] sm:$0xff] %v535
        %552 = vst [vmem:[%s254 + $0x10] sm:$0xff] %v536
        %553 = vst [vmem:[%s254 + $0x18] sm:$0xff] %v537
        %554 = vst [vmem:[%s254 + $0x20] sm:$0xff] %v538
        %555 = vst [vmem:[%s254 + $0x28] sm:$0xff] %v539
        %556 = vst [vmem:[%s254 + $0x30] sm:$0xff] %v540
        %557 = vst [vmem:[%s254 + $0x38] sm:$0xff] %v541
        %s558 = smul.u32 4, %s22
        %p559 = scmp.lt.s32.totalorder %s21, 1
        %s560 = scalar_select %p559, %s21, 1
        %p561 = scmp.lt.s32.totalorder %s558, 11
        %s562 = scalar_select %p561, %s558, 11
        %s563 = smul.addr %s562, 4
        %s564 = smul.addr %s560, 48
        %s565 = sadd.s32 %s563, %s564
        %s566 = smul.addr %s565, 4
        %s567 = scalar_lea.vmem %s3, %s566
        // Predicated region
        $region37: #{blstm_encoder_forward.2} parent=31 // pred_check
          %p568 = pneg %p127
        $region38: #{blstm_encoder_forward.2} parent=31 // pred_check_branch
          %570 = sbr.rel (%p568) target = $region40
        $region39: #{blstm_encoder_forward.2} parent=31 // pred_region
          %s571 = smul.u32 4, %s22
        $region40: #{blstm_encoder_forward.2} parent=31 // pred_fallthru
          _
      $region32: #{blstm_encoder_forward.2} parent=5 // pred_fallthru
        _
      %p572 = scmp.le.s32.totalorder 2, %s12
      // Predicated region
      $region41: #{blstm_encoder_forward.2} parent=5 // pred_check
        %p573 = pneg %p572
      $region42: #{blstm_encoder_forward.2} parent=5 // pred_check_branch
        %575 = sbr.rel (%p573) target = $region44
      $region43: #{blstm_encoder_forward.2} parent=5 // pred_region
        %s576 = ssub.s32 %s12, 2
        // Predicated region
        $region45: #{blstm_encoder_forward.2} parent=43 // pred_check
          %p577 = pneg %p133
        $region46: #{blstm_encoder_forward.2} parent=43 // pred_check_branch
          %579 = sbr.rel (%p577) target = $region48
        $region47: #{blstm_encoder_forward.2} parent=43 // pred_region
          %s580 = smul.u32 4, %s24
          %p581 = scmp.lt.s32.totalorder %s23, 1
          %s582 = scalar_select %p581, %s23, 1
          %p583 = scmp.lt.s32.totalorder %s580, 11
          %s584 = scalar_select %p583, %s580, 11
          %s585 = smul.addr %s584, 4
          %s586 = smul.addr %s582, 48
          %s587 = sadd.s32 %s585, %s586
          %s588 = smul.addr %s587, 4
          %s589 = scalar_lea.vmem %s3, %s588
        $region48: #{blstm_encoder_forward.2} parent=43 // pred_fallthru
          _
      $region44: #{blstm_encoder_forward.2} parent=5 // pred_fallthru
        _
    $region6: #{blstm_encoder_forward.2} parent=1 // loop_footer
      %s16 = sadd.s32 1, %s12
    $region7: #{blstm_encoder_forward.2} parent=1 // loop_footer_branch
      %11 = sbr.rel target = $region3
    $region8: #{blstm_encoder_forward.2} parent=1 // loop_exit
      _
    %590 = vsyncpa [#allocation3], 1
    %s591 = scalar_lea.sflag [#allocation3], 1
    %592 = vsyncpa %s591, 1

// kernel: blstm_encoder_forward.3
$region0: #{blstm_encoder_forward.3}
  #allocation0 [shape = 'u32[]', space=smem, size = 0x4, offset = 0x4, fixed_abs, tag = 'smem constant byte address 0x4 - core index']
  #allocation1 [shape = 'u32[144,128]{1,0:T(1,128)}', space=vmem, size = 0x12000, scoped, tag = 'internal scratch']
  #allocation2 [shape = 'bf16[128,512]{1,0:T(8,128)(2,1)}', space=vmem, size = 0x20000, scoped, tag = 'scratch operand']
  #allocation3 [shape = 's32[1]{0}', space=sflag, size = 0x4, scoped, tag = 'scratch operand']
  #allocation4 [shape = 'bf16[8,128]{1,0:T(8,128)(2,1)}', space=vmem, size = 0x800, scoped, tag = 'scratch operand']
  #allocation5 [shape = 'f32[8,128]{1,0:T(8,128)}', space=vmem, size = 0x1000, scoped, tag = 'scratch operand']
  #allocation6 [shape = 's32[]', space=sflag, size = 0x4, offset = 0, fixed_abs, tag = 'sflag constant byte address 0x0 - dummy sync flag']
  %s0 = inlined_call_operand.vmem [shape: s32[8,1], index: 0, kind: input, shape index: {}]
  %s1 = inlined_call_operand.vmem [shape: bf16[2,12,8,512], index: 1, kind: input, shape index: {}]
  %s2 = inlined_call_operand.vmem [shape: bf16[2,128,512], index: 2, kind: input, shape index: {}]
  %s3 = inlined_call_operand.vmem [shape: f32[2,8,128], index: 3, kind: output, shape index: {}]
  %s4 = sld [smem:[#allocation0]]
  $region87: #{blstm_encoder_forward.3} parent=0
    _
  %s6 = ssub.s32 1, %s4
  %s7 = scalar_select 0, %s6, %s4
  loop: start=0, step=1, limit=8
  $region2: #{blstm_encoder_forward.3} parent=0 // loop_pre_header
    _
  $region3: #{blstm_encoder_forward.3} parent=0 // loop_header
    %s9 = sphi 0, %s13
    %p10 = scmp.ge.s32.totalorder %s9, 8
    %s16 = sphi 0, %s28
    %s17 = sphi 0, %s24
    %s18 = sphi 0, %s16
    %s19 = sphi 0, %s17
    %s20 = sphi 0, %s18
    %s21 = sphi 0, %s19
    %s29 = sphi 0, %s29
    %s31 = sphi 0, %s29
    %s32 = sphi 0, %s31
    %s46 = sphi 0, %s32
    %s60 = sphi 0, %s62
    %s63 = sphi 0, %s60
    %s64 = sphi 0, %s63
    %s80 = sphi 0, %s64
    %s86 = sphi 0, %s88
    %s89 = sphi 0, %s86
    %s90 = sphi 0, %s89
    %s106 = sphi 0, %s90
  $region4: #{blstm_encoder_forward.3} parent=0 // loop_header_branch
    %12 = sbr.rel (%p10) target = $region8
  $region5: #{blstm_encoder_forward.3} parent=0 // loop_body
    %s14 = ssub.s32 %s9, 1
    %s15 = ssub.s32 %s9, 2
    %s22 = sadd.s32 1, %s17
    %p23 = scmp.ge.s32.totalorder %s22, 3
    %s24 = scalar_select %p23, 0, %s22
    %s25 = sadd.s32 1, %s16
    %s26 = scalar_select %p23, %s25, %s16
    %p27 = scmp.ge.s32.totalorder %s26, 2
    %s28 = scalar_select %p27, 0, %s26
    %s30 = sadd.s32 %s29, 1
    %p33 = scmp.eq.s32.totalorder %s9, 5
    %p34 = scmp.ne.s32.totalorder %s29, %s31
    %p35 = scmp.eq.s32.totalorder %s9, 0
    %p36 = por %p34, %p35
    %p37 = scmp.ne.s32.totalorder %s29, %s31
    %p38 = scmp.eq.s32.totalorder %s14, 5
    %p39 = por %p37, %p38
    %p40 = scmp.ne.s32.totalorder %s31, %s32
    %p41 = scmp.eq.s32.totalorder %s14, 0
    %p42 = por %p40, %p41
    %p43 = scmp.ne.s32.totalorder %s31, %s32
    %p44 = scmp.eq.s32.totalorder %s15, 5
    %p45 = por %p43, %p44
    %p47 = scmp.ne.s32.totalorder %s32, %s46
    %p48 = scmp.eq.s32.totalorder %s15, 0
    %p49 = por %p47, %p48
    %p50 = scmp.eq.s32.totalorder %s16, 0
    %s51 = ssub.s32 2, %s17
    %s52 = scalar_select %p50, %s17, %s51
    %p53 = scmp.eq.s32.totalorder %s28, 0
    %s54 = ssub.s32 2, %s24
    %s55 = scalar_select %p53, %s24, %s54
    %s56 = ssub.s32 %s16, %s28
    %s57 = ssub.s32 %s52, %s55
    %s58 = sor.u32 %s56, %s57
    %p59 = scmp.eq.s32.totalorder %s58, 0
    %s61 = sadd.s32 %s60, 1
    %s62 = scalar_select %p59, %s60, %s61
    %p65 = pneg %p59
    %p66 = scmp.eq.s32.totalorder %s9, 5
    %p67 = por %p65, %p66
    %p68 = scmp.ne.s32.totalorder %s60, %s63
    %p69 = scmp.eq.s32.totalorder %s9, 0
    %p70 = por %p68, %p69
    %p71 = scmp.ne.s32.totalorder %s60, %s63
    %p72 = scmp.eq.s32.totalorder %s14, 5
    %p73 = por %p71, %p72
    %p74 = scmp.ne.s32.totalorder %s63, %s64
    %p75 = scmp.eq.s32.totalorder %s14, 0
    %p76 = por %p74, %p75
    %p77 = scmp.ne.s32.totalorder %s63, %s64
    %p78 = scmp.eq.s32.totalorder %s15, 5
    %p79 = por %p77, %p78
    %p81 = scmp.ne.s32.totalorder %s64, %s80
    %p82 = scmp.eq.s32.totalorder %s15, 0
    %p83 = por %p81, %p82
    %s84 = ssub.s32 %s16, %s28
    %p85 = scmp.eq.s32.totalorder %s84, 0
    %s87 = sadd.s32 %s86, 1
    %s88 = scalar_select %p85, %s86, %s87
    %p91 = pneg %p85
    %p92 = scmp.eq.s32.totalorder %s9, 5
    %p93 = por %p91, %p92
    %p94 = scmp.ne.s32.totalorder %s86, %s89
    %p95 = scmp.eq.s32.totalorder %s9, 0
    %p96 = por %p94, %p95
    %p97 = scmp.ne.s32.totalorder %s86, %s89
    %p98 = scmp.eq.s32.totalorder %s14, 5
    %p99 = por %p97, %p98
    %p100 = scmp.ne.s32.totalorder %s89, %s90
    %p101 = scmp.eq.s32.totalorder %s14, 0
    %p102 = por %p100, %p101
    %p103 = scmp.ne.s32.totalorder %s89, %s90
    %p104 = scmp.eq.s32.totalorder %s15, 5
    %p105 = por %p103, %p104
    %p107 = scmp.ne.s32.totalorder %s90, %s106
    %p108 = scmp.eq.s32.totalorder %s15, 0
    %p109 = por %p107, %p108
    %p110 = scmp.le.s32.totalorder 1, %s9
    %p111 = scmp.lt.s32.totalorder %s9, 7
    %p112 = pnand %p110, %p111
    %p113 = pneg %p112
    // Predicated region
    $region9: #{blstm_encoder_forward.3} parent=5 // pred_check
      _
    $region10: #{blstm_encoder_forward.3} parent=5 // pred_check_branch
      %115 = sbr.rel (%p112) target = $region12
    $region11: #{blstm_encoder_forward.3} parent=5 // pred_region
      %s116 = ssub.s32 %s9, 1
      // Predicated region
      $region13: #{blstm_encoder_forward.3} parent=11 // pred_check
        %p117 = pneg %p42
      $region14: #{blstm_encoder_forward.3} parent=11 // pred_check_branch
        %119 = sbr.rel (%p117) target = $region16
      $region15: #{blstm_encoder_forward.3} parent=11 // pred_region
        _
      $region16: #{blstm_encoder_forward.3} parent=11 // pred_fallthru
        _
    $region12: #{blstm_encoder_forward.3} parent=5 // pred_fallthru
      _
    %p120 = scmp.lt.s32.totalorder %s9, 6
    // Predicated region
    $region17: #{blstm_encoder_forward.3} parent=5 // pred_check
      %p121 = pneg %p120
    $region18: #{blstm_encoder_forward.3} parent=5 // pred_check_branch
      %123 = sbr.rel (%p121) target = $region20
    $region19: #{blstm_encoder_forward.3} parent=5 // pred_region
      // Predicated region
      $region21: #{blstm_encoder_forward.3} parent=19 // pred_check
        %p124 = pneg %p70
      $region22: #{blstm_encoder_forward.3} parent=19 // pred_check_branch
        %126 = sbr.rel (%p124) target = $region24
      $region23: #{blstm_encoder_forward.3} parent=19 // pred_region
        %p127 = scmp.eq.s32.totalorder %s16, 0
        %s128 = ssub.s32 2, %s17
        %s129 = scalar_select %p127, %s17, %s128
        %s130 = smul.u32 4, %s129
        %p131 = scmp.lt.s32.totalorder %s16, 1
        %s132 = scalar_select %p131, %s16, 1
        %p133 = scmp.lt.s32.totalorder %s130, 11
        %s134 = scalar_select %p133, %s130, 11
        %s135 = smul.addr %s134, 4
        %s136 = smul.addr %s132, 48
        %s137 = sadd.s32 %s135, %s136
        %s138 = smul.addr %s137, 4
        %s139 = scalar_lea.vmem %s1, %s138
        %p140 = scmp.eq.s32.totalorder %s16, 0
        %s141 = ssub.s32 2, %s17
        %s142 = scalar_select %p140, %s17, %s141
        %s143 = smul.u32 4, %s142
      $region24: #{blstm_encoder_forward.3} parent=19 // pred_fallthru
        _
    $region20: #{blstm_encoder_forward.3} parent=5 // pred_fallthru
      _
    %p144 = scmp.le.s32.totalorder 1, %s9
    %p145 = scmp.lt.s32.totalorder %s9, 7
    %p146 = pnand %p144, %p145
    %p147 = pneg %p146
    // Predicated region
    $region25: #{blstm_encoder_forward.3} parent=5 // pred_check
      _
    $region26: #{blstm_encoder_forward.3} parent=5 // pred_check_branch
      %149 = sbr.rel (%p146) target = $region28
    $region27: #{blstm_encoder_forward.3} parent=5 // pred_region
      %s150 = ssub.s32 %s9, 1
      %p151 = pneg %p42
      %p152 = pneg %p39
      %p153 = scmp.eq.s32.totalorder %s18, 0
      %s154 = ssub.s32 2, %s19
      %s155 = scalar_select %p153, %s19, %s154
      %s156 = smul.u32 4, %s155
      %p157 = scmp.lt.s32.totalorder %s18, 1
      %s158 = scalar_select %p157, %s18, 1
      %p159 = scmp.lt.s32.totalorder %s156, 11
      %s160 = scalar_select %p159, %s156, 11
      %s161 = smul.addr %s160, 4
      %s162 = smul.addr %s158, 48
      %s163 = sadd.s32 %s161, %s162
      %s164 = smul.addr %s163, 4
      %s165 = scalar_lea.vmem %s1, %s164
      %p166 = pneg %p76
      %p167 = pneg %p73
      %p168 = pneg %p102
      %p169 = pneg %p99
      %p170 = scmp.lt.s32.totalorder %s18, 1
      %s171 = scalar_select %p170, %s18, 1
      %s172 = smul.addr %s171, 8
      %s173 = scalar_lea.vmem %s3, %s172
      %p174 = scmp.eq.s32.totalorder %s18, 0
      %s175 = ssub.s32 2, %s19
      %s176 = scalar_select %p174, %s19, %s175
      %s177 = smul.u32 4, %s176
      %p178 = scmp.lt.s32.totalorder %s18, 1
      %s179 = scalar_select %p178, %s18, 1
      %p180 = scmp.lt.s32.totalorder %s177, 11
      %s181 = scalar_select %p180, %s177, 11
      %s182 = smul.addr %s181, 4
      %s183 = smul.addr %s179, 48
      %s184 = sadd.s32 %s182, %s183
      %s185 = smul.addr %s184, 4
      %s186 = scalar_lea.vmem %s1, %s185
      %p187 = scmp.eq.s32.totalorder %s18, 0
      %s188 = ssub.s32 2, %s19
      %s189 = scalar_select %p187, %s19, %s188
      %s190 = smul.u32 4, %s189
      %p191 = scmp.lt.s32.totalorder %s18, 1
      %s192 = scalar_select %p191, %s18, 1
      %s193 = smul.addr %s192, 8
      %s194 = scalar_lea.vmem %s3, %s193
      %p196 = scmp.eq.s32.totalorder %s19, 0
      // Predicated region
      $region29: #{blstm_encoder_forward.3} parent=27 // pred_check
        %p197 = pneg %p196
      $region30: #{blstm_encoder_forward.3} parent=27 // pred_check_branch
        %199 = sbr.rel (%p197) target = $region32
      $region31: #{blstm_encoder_forward.3} parent=27 // pred_region
        %200 = vst [vmem:[#allocation4] sm:$0xf] 0
        %201 = vst [vmem:[#allocation5] sm:$0xff] 0.0
        %s202 = smul.u32 %s18, 64
        %s203 = smul.addr %s202, 4
        %s204 = scalar_lea.vmem %s2, %s203
        %p206 = scmp.lt.u32.totalorder 256, 8
        %p207 = pneg %p206
        // Predicated region
        $region33: #{blstm_encoder_forward.3} parent=31 // pred_check
          _
        $region34: #{blstm_encoder_forward.3} parent=31 // pred_check_branch
          %209 = sbr.rel (%p206) target = $region36
        $region35: #{blstm_encoder_forward.3} parent=31 // pred_region
          %s225 = sand.u32 256, 7
          %p226 = scmp.eq.s32.totalorder %s225, 0
          // Predicated region
          $region48: #{blstm_encoder_forward.3} parent=35 // pred_check
            %p227 = pneg %p226
          $region49: #{blstm_encoder_forward.3} parent=35 // pred_check_branch
            %229 = sbr.rel (%p227) target = $region51
          $region50: #{blstm_encoder_forward.3} parent=35 // pred_region
            loop: start=0, step=1, limit=1
            $region52: #{blstm_encoder_forward.3} parent=50 // loop_pre_header
              _
            $region53: #{blstm_encoder_forward.3} parent=50 // loop_header
              %s231 = sphi 0, %s235
              %p232 = scmp.ge.s32.totalorder %s231, 1
              %s236 = sphi %s204, %s204
              %s237 = sphi [#allocation2], [#allocation2]
            $region54: #{blstm_encoder_forward.3} parent=50 // loop_header_branch
              %234 = sbr.rel (%p232) target = $region58
            $region55: #{blstm_encoder_forward.3} parent=50 // loop_body
              %v238 = vld [vmem:[%s236] sm:$0xff]
              %239 = vst [vmem:[%s237] sm:$0xff] %v238
              %v240 = vld [vmem:[%s236 + $0x8] sm:$0xff]
              %241 = vst [vmem:[%s237 + $0x8] sm:$0xff] %v240
              %v242 = vld [vmem:[%s236 + $0x10] sm:$0xff]
              %243 = vst [vmem:[%s237 + $0x10] sm:$0xff] %v242
              %v244 = vld [vmem:[%s236 + $0x18] sm:$0xff]
              %245 = vst [vmem:[%s237 + $0x18] sm:$0xff] %v244
              %v246 = vld [vmem:[%s236 + $0x20] sm:$0xff]
              %247 = vst [vmem:[%s237 + $0x20] sm:$0xff] %v246
              %v248 = vld [vmem:[%s236 + $0x28] sm:$0xff]
              %249 = vst [vmem:[%s237 + $0x28] sm:$0xff] %v248
              %v250 = vld [vmem:[%s236 + $0x30] sm:$0xff]
              %251 = vst [vmem:[%s237 + $0x30] sm:$0xff] %v250
              %v252 = vld [vmem:[%s236 + $0x38] sm:$0xff]
              %253 = vst [vmem:[%s237 + $0x38] sm:$0xff] %v252
              %v254 = vld [vmem:[%s236 + $0x40] sm:$0xff]
              %255 = vst [vmem:[%s237 + $0x40] sm:$0xff] %v254
              %v256 = vld [vmem:[%s236 + $0x48] sm:$0xff]
              %257 = vst [vmem:[%s237 + $0x48] sm:$0xff] %v256
              %v258 = vld [vmem:[%s236 + $0x50] sm:$0xff]
              %259 = vst [vmem:[%s237 + $0x50] sm:$0xff] %v258
              %v260 = vld [vmem:[%s236 + $0x58] sm:$0xff]
              %261 = vst [vmem:[%s237 + $0x58] sm:$0xff] %v260
              %v262 = vld [vmem:[%s236 + $0x60] sm:$0xff]
              %263 = vst [vmem:[%s237 + $0x60] sm:$0xff] %v262
              %v264 = vld [vmem:[%s236 + $0x68] sm:$0xff]
              %265 = vst [vmem:[%s237 + $0x68] sm:$0xff] %v264
              %v266 = vld [vmem:[%s236 + $0x70] sm:$0xff]
              %267 = vst [vmem:[%s237 + $0x70] sm:$0xff] %v266
              %v268 = vld [vmem:[%s236 + $0x78] sm:$0xff]
              %269 = vst [vmem:[%s237 + $0x78] sm:$0xff] %v268
              %v270 = vld [vmem:[%s236 + $0x80] sm:$0xff]
              %271 = vst [vmem:[%s237 + $0x80] sm:$0xff] %v270
              %v272 = vld [vmem:[%s236 + $0x88] sm:$0xff]
              %273 = vst [vmem:[%s237 + $0x88] sm:$0xff] %v272
              %v274 = vld [vmem:[%s236 + $0x90] sm:$0xff]
              %275 = vst [vmem:[%s237 + $0x90] sm:$0xff] %v274
              %v276 = vld [vmem:[%s236 + $0x98] sm:$0xff]
              %277 = vst [vmem:[%s237 + $0x98] sm:$0xff] %v276
              %v278 = vld [vmem:[%s236 + $0xa0] sm:$0xff]
              %279 = vst [vmem:[%s237 + $0xa0] sm:$0xff] %v278
              %v280 = vld [vmem:[%s236 + $0xa8] sm:$0xff]
              %281 = vst [vmem:[%s237 + $0xa8] sm:$0xff] %v280
              %v282 = vld [vmem:[%s236 + $0xb0] sm:$0xff]
              %283 = vst [vmem:[%s237 + $0xb0] sm:$0xff] %v282
              %v284 = vld [vmem:[%s236 + $0xb8] sm:$0xff]
              %285 = vst [vmem:[%s237 + $0xb8] sm:$0xff] %v284
              %v286 = vld [vmem:[%s236 + $0xc0] sm:$0xff]
              %287 = vst [vmem:[%s237 + $0xc0] sm:$0xff] %v286
              %v288 = vld [vmem:[%s236 + $0xc8] sm:$0xff]
              %289 = vst [vmem:[%s237 + $0xc8] sm:$0xff] %v288
              %v290 = vld [vmem:[%s236 + $0xd0] sm:$0xff]
              %291 = vst [vmem:[%s237 + $0xd0] sm:$0xff] %v290
              %v292 = vld [vmem:[%s236 + $0xd8] sm:$0xff]
              %293 = vst [vmem:[%s237 + $0xd8] sm:$0xff] %v292
              %v294 = vld [vmem:[%s236 + $0xe0] sm:$0xff]
              %295 = vst [vmem:[%s237 + $0xe0] sm:$0xff] %v294
              %v296 = vld [vmem:[%s236 + $0xe8] sm:$0xff]
              %297 = vst [vmem:[%s237 + $0xe8] sm:$0xff] %v296
              %v298 = vld [vmem:[%s236 + $0xf0] sm:$0xff]
              %299 = vst [vmem:[%s237 + $0xf0] sm:$0xff] %v298
              %v300 = vld [vmem:[%s236 + $0xf8] sm:$0xff]
              %301 = vst [vmem:[%s237 + $0xf8] sm:$0xff] %v300
            $region56: #{blstm_encoder_forward.3} parent=50 // loop_footer
              %s235 = sadd.s32 1, %s231
            $region57: #{blstm_encoder_forward.3} parent=50 // loop_footer_branch
              %230 = sbr.rel target = $region53
            $region58: #{blstm_encoder_forward.3} parent=50 // loop_exit
              _
          $region51: #{blstm_encoder_forward.3} parent=35 // pred_fallthru
            _
          %p302 = pneg %p226
          // Predicated region
          $region59: #{blstm_encoder_forward.3} parent=35 // pred_check
            _
          $region60: #{blstm_encoder_forward.3} parent=35 // pred_check_branch
            %304 = sbr.rel (%p226) target = $region62
          $region61: #{blstm_encoder_forward.3} parent=35 // pred_region
            %s305 = sand.u32 256, 7
          $region62: #{blstm_encoder_forward.3} parent=35 // pred_fallthru
            _
        $region36: #{blstm_encoder_forward.3} parent=31 // pred_fallthru
          _
        // Predicated region
        $region37: #{blstm_encoder_forward.3} parent=31 // pred_check
          %p210 = pneg %p206
        $region38: #{blstm_encoder_forward.3} parent=31 // pred_check_branch
          %212 = sbr.rel (%p210) target = $region40
        $region39: #{blstm_encoder_forward.3} parent=31 // pred_region
          %s213 = sshll.u32 1, 256
          %s214 = ssub.s32 %s213, 1
          loop: start=0, step=1, limit=1
          $region41: #{blstm_encoder_forward.3} parent=39 // loop_pre_header
            _
          $region42: #{blstm_encoder_forward.3} parent=39 // loop_header
            %s216 = sphi 0, %s220
            %p217 = scmp.ge.s32.totalorder %s216, 1
            %s221 = sphi %s204, %s204
            %s222 = sphi [#allocation2], [#allocation2]
          $region43: #{blstm_encoder_forward.3} parent=39 // loop_header_branch
            %219 = sbr.rel (%p217) target = $region47
          $region44: #{blstm_encoder_forward.3} parent=39 // loop_body
            %v223 = vld [vmem:[%s221] sm:%s214]
            %224 = vst [vmem:[%s222] sm:%s214] %v223
          $region45: #{blstm_encoder_forward.3} parent=39 // loop_footer
            %s220 = sadd.s32 1, %s216
          $region46: #{blstm_encoder_forward.3} parent=39 // loop_footer_branch
            %215 = sbr.rel target = $region42
          $region47: #{blstm_encoder_forward.3} parent=39 // loop_exit
            _
        $region40: #{blstm_encoder_forward.3} parent=31 // pred_fallthru
          _
        // Predicated region
        $region63: #{blstm_encoder_forward.3} parent=31 // pred_check
          _
        $region64: #{blstm_encoder_forward.3} parent=31 // pred_check_branch
          %308 = sbr.rel (0) target = $region66
        $region65: #{blstm_encoder_forward.3} parent=31 // pred_region
          %309 = vsyncadd [#allocation3], 4096
        $region66: #{blstm_encoder_forward.3} parent=31 // pred_fallthru
          _
        %s310 = smul.u32 4, 16
        %s311 = smul.u32 %s310, 4
        %s312 = sshll.u32 %s311, 4
        %313 = dma.done [#allocation3], %s312
      $region32: #{blstm_encoder_forward.3} parent=27 // pred_fallthru
        _
      %v314 = vld [vmem:[%s0] sm:$0xff]
      %v315 = vld [vmem:[#allocation2] sm:$0xff]
      %v316 = vld [vmem:[#allocation2 + $0x8] sm:$0xff]
      %v317 = vld [vmem:[#allocation2 + $0x10] sm:$0xff]
      %v318 = vld [vmem:[#allocation2 + $0x18] sm:$0xff]
      %v319 = vld [vmem:[#allocation2 + $0x20] sm:$0xff]
      %v320 = vld [vmem:[#allocation2 + $0x28] sm:$0xff]
      %v321 = vld [vmem:[#allocation2 + $0x30] sm:$0xff]
      %v322 = vld [vmem:[#allocation2 + $0x38] sm:$0xff]
      %v323 = vld [vmem:[#allocation2 + $0x40] sm:$0xff]
      %v324 = vld [vmem:[#allocation2 + $0x48] sm:$0xff]
      %v325 = vld [vmem:[#allocation2 + $0x50] sm:$0xff]
      %v326 = vld [vmem:[#allocation2 + $0x58] sm:$0xff]
      %v327 = vld [vmem:[#allocation2 + $0x60] sm:$0xff]
      %v328 = vld [vmem:[#allocation2 + $0x68] sm:$0xff]
      %v329 = vld [vmem:[#allocation2 + $0x70] sm:$0xff]
      %v330 = vld [vmem:[#allocation2 + $0x78] sm:$0xff]
      %v331 = vld [vmem:[#allocation2 + $0x80] sm:$0xff]
      %v332 = vld [vmem:[#allocation2 + $0x88] sm:$0xff]
      %v333 = vld [vmem:[#allocation2 + $0x90] sm:$0xff]
      %v334 = vld [vmem:[#allocation2 + $0x98] sm:$0xff]
      %v335 = vld [vmem:[#allocation2 + $0xa0] sm:$0xff]
      %v336 = vld [vmem:[#allocation2 + $0xa8] sm:$0xff]
      %v337 = vld [vmem:[#allocation2 + $0xb0] sm:$0xff]
      %v338 = vld [vmem:[#allocation2 + $0xb8] sm:$0xff]
      %v339 = vld [vmem:[#allocation2 + $0xc0] sm:$0xff]
      %v340 = vld [vmem:[#allocation2 + $0xc8] sm:$0xff]
      %v341 = vld [vmem:[#allocation2 + $0xd0] sm:$0xff]
      %v342 = vld [vmem:[#allocation2 + $0xd8] sm:$0xff]
      %v343 = vld [vmem:[#allocation2 + $0xe0] sm:$0xff]
      %v344 = vld [vmem:[#allocation2 + $0xe8] sm:$0xff]
      %v345 = vld [vmem:[#allocation2 + $0xf0] sm:$0xff]
      %v346 = vld [vmem:[#allocation2 + $0xf8] sm:$0xff]
      %p347 = scmp.eq.s32.totalorder %s18, 0
      %s348 = ssub.s32 2, %s19
      %s349 = scalar_select %p347, %s19, %s348
      %s350 = smul.u32 %s349, 4
      %v351 = vld [vmem:[#allocation4] sm:$0xf]
      %v352 = vld [vmem:[#allocation5] sm:$0xff]
      %s353 = scalar_select %p347, 0, 3
      %s354 = sadd.s32 %s350, %s353
      %s355 = smul.u32 %s353, 4
      %s356 = smul.addr %s355, 4
      %s357 = scalar_lea.vmem %s186, %s356
      %v358 = vld [vmem:[%s357] sm:$0xff]
      %v359 = vld [vmem:[%s357 + $0x8] sm:$0xff]
      %v360 = vunpack.c.l.bf16 %v358
      %v361 = vunpack.c.h.bf16 %v358
      %v362 = vunpack.c.l.bf16 %v359
      %v363 = vunpack.c.h.bf16 %v359
      %v396 = vunpack.c.l.b16 %v315
      %v397 = vunpack.c.h.b16 %v315
      %v398 = vunpack.c.l.b16 %v316
      %v399 = vunpack.c.h.b16 %v316
      %v400 = vunpack.c.l.b16 %v317
      %v401 = vunpack.c.h.b16 %v317
      %v402 = vunpack.c.l.b16 %v318
      %v403 = vunpack.c.h.b16 %v318
      %v404 = vunpack.c.l.b16 %v319
      %v405 = vunpack.c.h.b16 %v319
      %v406 = vunpack.c.l.b16 %v320
      %v407 = vunpack.c.h.b16 %v320
      %v408 = vunpack.c.l.b16 %v321
      %v409 = vunpack.c.h.b16 %v321
      %v410 = vunpack.c.l.b16 %v322
      %v411 = vunpack.c.h.b16 %v322
      %v412 = vunpack.c.l.b16 %v323
      %v413 = vunpack.c.h.b16 %v323
      %v414 = vunpack.c.l.b16 %v324
      %v415 = vunpack.c.h.b16 %v324
      %v416 = vunpack.c.l.b16 %v325
      %v417 = vunpack.c.h.b16 %v325
      %v418 = vunpack.c.l.b16 %v326
      %v419 = vunpack.c.h.b16 %v326
      %v420 = vunpack.c.l.b16 %v327
      %v421 = vunpack.c.h.b16 %v327
      %v422 = vunpack.c.l.b16 %v328
      %v423 = vunpack.c.h.b16 %v328
      %v424 = vunpack.c.l.b16 %v329
      %v425 = vunpack.c.h.b16 %v329
      %v426 = vunpack.c.l.b16 %v330
      %v427 = vunpack.c.h.b16 %v330
      %v428 = vunpack.c.l.b16 %v331
      %v429 = vunpack.c.h.b16 %v331
      %v430 = vunpack.c.l.b16 %v332
      %v431 = vunpack.c.h.b16 %v332
      %v432 = vunpack.c.l.b16 %v333
      %v433 = vunpack.c.h.b16 %v333
      %v434 = vunpack.c.l.b16 %v334
      %v435 = vunpack.c.h.b16 %v334
      %v436 = vunpack.c.l.b16 %v335
      %v437 = vunpack.c.h.b16 %v335
      %v438 = vunpack.c.l.b16 %v336
      %v439 = vunpack.c.h.b16 %v336
      %v440 = vunpack.c.l.b16 %v337
      %v441 = vunpack.c.h.b16 %v337
      %v442 = vunpack.c.l.b16 %v338
      %v443 = vunpack.c.h.b16 %v338
      %v444 = vunpack.c.l.b16 %v339
      %v445 = vunpack.c.h.b16 %v339
      %v446 = vunpack.c.l.b16 %v340
      %v447 = vunpack.c.h.b16 %v340
      %v448 = vunpack.c.l.b16 %v341
      %v449 = vunpack.c.h.b16 %v341
      %v450 = vunpack.c.l.b16 %v342
      %v451 = vunpack.c.h.b16 %v342
      %v452 = vunpack.c.l.b16 %v343
      %v453 = vunpack.c.h.b16 %v343
      %v454 = vunpack.c.l.b16 %v344
      %v455 = vunpack.c.h.b16 %v344
      %v456 = vunpack.c.l.b16 %v345
      %v457 = vunpack.c.h.b16 %v345
      %v458 = vunpack.c.l.b16 %v346
      %v459 = vunpack.c.h.b16 %v346
      %v460 = vpack.c.b16 %v400, %v396
      %v461 = vpack.c.b16 %v401, %v397
      %v462 = vpack.c.b16 %v402, %v398
      %v463 = vpack.c.b16 %v403, %v399
      %v464 = vpack.c.b16 %v408, %v404
      %v465 = vpack.c.b16 %v409, %v405
      %v466 = vpack.c.b16 %v410, %v406
      %v467 = vpack.c.b16 %v411, %v407
      %v468 = vpack.c.b16 %v416, %v412
      %v469 = vpack.c.b16 %v417, %v413
      %v470 = vpack.c.b16 %v418, %v414
      %v471 = vpack.c.b16 %v419, %v415
      %v472 = vpack.c.b16 %v424, %v420
      %v473 = vpack.c.b16 %v425, %v421
      %v474 = vpack.c.b16 %v426, %v422
      %v475 = vpack.c.b16 %v427, %v423
      %v476 = vpack.c.b16 %v432, %v428
      %v477 = vpack.c.b16 %v433, %v429
      %v478 = vpack.c.b16 %v434, %v430
      %v479 = vpack.c.b16 %v435, %v431
      %v480 = vpack.c.b16 %v440, %v436
      %v481 = vpack.c.b16 %v441, %v437
      %v482 = vpack.c.b16 %v442, %v438
      %v483 = vpack.c.b16 %v443, %v439
      %v484 = vpack.c.b16 %v448, %v444
      %v485 = vpack.c.b16 %v449, %v445
      %v486 = vpack.c.b16 %v450, %v446
      %v487 = vpack.c.b16 %v451, %v447
      %v488 = vpack.c.b16 %v456, %v452
      %v489 = vpack.c.b16 %v457, %v453
      %v490 = vpack.c.b16 %v458, %v454
      %v491 = vpack.c.b16 %v459, %v455
      %524 = vmatprep.subr.bf16.mxu0 %v489
      %525 = vmatpush1.bf16.msra.mxu0 %v488
      %526 = vmatprep.subr.bf16.mxu0 %v485
      %527 = vmatpush1.bf16.msra.mxu0 %v484
      %528 = vmatprep.subr.bf16.mxu0 %v481
      %529 = vmatpush1.bf16.msra.mxu0 %v480
      %530 = vmatprep.subr.bf16.mxu0 %v477
      %531 = vmatpush1.bf16.msra.mxu0 %v476
      %532 = vmatprep.subr.bf16.mxu0 %v473
      %533 = vmatpush1.bf16.msra.mxu0 %v472
      %534 = vmatprep.subr.bf16.mxu0 %v469
      %535 = vmatpush1.bf16.msra.mxu0 %v468
      %536 = vmatprep.subr.bf16.mxu0 %v465
      %537 = vmatpush1.bf16.msra.mxu0 %v464
      %538 = vmatprep.subr.bf16.mxu0 %v461
      %539 = vmatpush1.bf16.msra.mxu0 %v460
      %540 = vmatprep.subr.bf16.mxu0 0
      %541 = vmatpush2.bf16.msra.mxu0 0
      %542 = vmatprep.subr.bf16.mxu0 0
      %543 = vmatpush2.bf16.msra.mxu0 0
      %544 = vmatprep.subr.bf16.mxu0 0
      %545 = vmatpush2.bf16.msra.mxu0 0
      %546 = vmatprep.subr.bf16.mxu0 0
      %547 = vmatpush2.bf16.msra.mxu0 0
      %548 = vmatprep.subr.bf16.mxu0 0
      %549 = vmatpush2.bf16.msra.mxu0 0
      %550 = vmatprep.subr.bf16.mxu0 0
      %551 = vmatpush2.bf16.msra.mxu0 0
      %552 = vmatprep.subr.bf16.mxu0 0
      %553 = vmatpush2.bf16.msra.mxu0 0
      %554 = vmatprep.subr.bf16.mxu0 0
      %555 = vmatpush2.bf16.msra.mxu0 0
      %556 = vmatprep.mubr.bf16.mxu0 0
      %557 = vmatmul.mubr.bf16.gmra.mxu0 %v351
      %v558 = vpop.f32.mrf.mxu0
      %v559 = vadd.f32 0.0, %v558
      %v560 = vpop.f32.mrf.mxu0
      %v561 = vadd.f32 0.0, %v560
      %v562 = vpop.f32.mrf.mxu0
      %v563 = vpop.f32.mrf.mxu0
      %564 = vdwg.mxu0
      %565 = vmatprep.subr.bf16.mxu0 %v491
      %566 = vmatpush1.bf16.msra.mxu0 %v490
      %567 = vmatprep.subr.bf16.mxu0 %v487
      %568 = vmatpush1.bf16.msra.mxu0 %v486
      %569 = vmatprep.subr.bf16.mxu0 %v483
      %570 = vmatpush1.bf16.msra.mxu0 %v482
      %571 = vmatprep.subr.bf16.mxu0 %v479
      %572 = vmatpush1.bf16.msra.mxu0 %v478
      %573 = vmatprep.subr.bf16.mxu0 %v475
      %574 = vmatpush1.bf16.msra.mxu0 %v474
      %575 = vmatprep.subr.bf16.mxu0 %v471
      %576 = vmatpush1.bf16.msra.mxu0 %v470
      %577 = vmatprep.subr.bf16.mxu0 %v467
      %578 = vmatpush1.bf16.msra.mxu0 %v466
      %579 = vmatprep.subr.bf16.mxu0 %v463
      %580 = vmatpush1.bf16.msra.mxu0 %v462
      %581 = vmatprep.subr.bf16.mxu0 0
      %582 = vmatpush2.bf16.msra.mxu0 0
      %583 = vmatprep.subr.bf16.mxu0 0
      %584 = vmatpush2.bf16.msra.mxu0 0
      %585 = vmatprep.subr.bf16.mxu0 0
      %586 = vmatpush2.bf16.msra.mxu0 0
      %587 = vmatprep.subr.bf16.mxu0 0
      %588 = vmatpush2.bf16.msra.mxu0 0
      %589 = vmatprep.subr.bf16.mxu0 0
      %590 = vmatpush2.bf16.msra.mxu0 0
      %591 = vmatprep.subr.bf16.mxu0 0
      %592 = vmatpush2.bf16.msra.mxu0 0
      %593 = vmatprep.subr.bf16.mxu0 0
      %594 = vmatpush2.bf16.msra.mxu0 0
      %595 = vmatprep.subr.bf16.mxu0 0
      %596 = vmatpush2.bf16.msra.mxu0 0
      %597 = vmatprep.mubr.bf16.mxu0 0
      %598 = vmatmul.mubr.bf16.gmra.mxu0 %v351
      %v599 = vpop.f32.mrf.mxu0
      %v600 = vadd.f32 0.0, %v599
      %v601 = vpop.f32.mrf.mxu0
      %v602 = vadd.f32 0.0, %v601
      %v603 = vpop.f32.mrf.mxu0
      %v604 = vpop.f32.mrf.mxu0
      %605 = vdwg.mxu0
      %v606 = vadd.f32 %v360, %v559
      %v607 = vadd.f32 %v361, %v561
      %v608 = vadd.f32 %v362, %v600
      %v609 = vadd.f32 %v363, %v602
      %v610 = vxor.u32 %v606, 2147483648
      %v611 = vmul.f32 %v610, 1.442695
      %v612 = vpow.pop %v611
      %v613 = vadd.f32 %v612, 1.0
      %v614 = vrcp.pop %v613
      %v615 = vmul.f32 1.0, %v614
      %v616 = vxor.u32 %v607, 2147483648
      %v617 = vmul.f32 %v616, 1.442695
      %v618 = vpow.pop %v617
      %v619 = vadd.f32 %v618, 1.0
      %v620 = vrcp.pop %v619
      %v621 = vmul.f32 1.0, %v620
      %v622 = vtanh.pop %v608
      %v623 = vxor.u32 %v609, 2147483648
      %v624 = vmul.f32 %v623, 1.442695
      %v625 = vpow.pop %v624
      %v626 = vadd.f32 %v625, 1.0
      %v627 = vrcp.pop %v626
      %v628 = vmul.f32 1.0, %v627
      %v629 = vmul.f32 %v621, %v352
      %v630 = vmul.f32 %v615, %v622
      %v631 = vadd.f32 %v629, %v630
      %v632 = vtanh.pop %v631
      %v633 = vmul.f32 %v628, %v632
      %v634 = vstv %s354
      %vm635 = vcmp.gt.s32.totalorder %v314, %v634
      %p636 = scmp.lt.s32.totalorder %s354, 10
      %s637 = scalar_select %p636, 0.0, -inf
      %v638 = vpack.c.bf16 %v633, %v633
      %v639 = vsel %vm635, 1, 0
      %640 = vset.pattern.permute.xlu0 0
      %641 = vperm.xlu0 %640, %v639
      %v642 = vpop.permute.xlu0 %641
      %vm643 = vcmp.eq.s32.totalorder %v642, 1
      %vm644 = vmpackc.low %vm643, %vm643
      %v645 = vsel %vm644, %v638, %v351
      %v646 = vsel %vm643, %v631, %v352
      %v647 = vstv %s637
      %v648 = vsel %vm643, %v633, %v647
      %s649 = scalar_select %p347, 1, 2
      %s650 = sadd.s32 %s350, %s649
      %s651 = smul.u32 %s649, 4
      %s652 = smul.addr %s651, 4
      %s653 = scalar_lea.vmem %s186, %s652
      %v654 = vld [vmem:[%s653] sm:$0xff]
      %v655 = vld [vmem:[%s653 + $0x8] sm:$0xff]
      %v656 = vunpack.c.l.bf16 %v654
      %v657 = vunpack.c.h.bf16 %v654
      %v658 = vunpack.c.l.bf16 %v655
      %v659 = vunpack.c.h.bf16 %v655
      %660 = vmatprep.subr.bf16.mxu0 %v489
      %661 = vmatpush1.bf16.msra.mxu0 %v488
      %662 = vmatprep.subr.bf16.mxu0 %v485
      %663 = vmatpush1.bf16.msra.mxu0 %v484
      %664 = vmatprep.subr.bf16.mxu0 %v481
      %665 = vmatpush1.bf16.msra.mxu0 %v480
      %666 = vmatprep.subr.bf16.mxu0 %v477
      %667 = vmatpush1.bf16.msra.mxu0 %v476
      %668 = vmatprep.subr.bf16.mxu0 %v473
      %669 = vmatpush1.bf16.msra.mxu0 %v472
      %670 = vmatprep.subr.bf16.mxu0 %v469
      %671 = vmatpush1.bf16.msra.mxu0 %v468
      %672 = vmatprep.subr.bf16.mxu0 %v465
      %673 = vmatpush1.bf16.msra.mxu0 %v464
      %674 = vmatprep.subr.bf16.mxu0 %v461
      %675 = vmatpush1.bf16.msra.mxu0 %v460
      %676 = vmatprep.subr.bf16.mxu0 0
      %677 = vmatpush2.bf16.msra.mxu0 0
      %678 = vmatprep.subr.bf16.mxu0 0
      %679 = vmatpush2.bf16.msra.mxu0 0
      %680 = vmatprep.subr.bf16.mxu0 0
      %681 = vmatpush2.bf16.msra.mxu0 0
      %682 = vmatprep.subr.bf16.mxu0 0
      %683 = vmatpush2.bf16.msra.mxu0 0
      %684 = vmatprep.subr.bf16.mxu0 0
      %685 = vmatpush2.bf16.msra.mxu0 0
      %686 = vmatprep.subr.bf16.mxu0 0
      %687 = vmatpush2.bf16.msra.mxu0 0
      %688 = vmatprep.subr.bf16.mxu0 0
      %689 = vmatpush2.bf16.msra.mxu0 0
      %690 = vmatprep.subr.bf16.mxu0 0
      %691 = vmatpush2.bf16.msra.mxu0 0
      %692 = vmatprep.mubr.bf16.mxu0 0
      %693 = vmatmul.mubr.bf16.gmra.mxu0 %v645
      %v694 = vpop.f32.mrf.mxu0
      %v695 = vadd.f32 0.0, %v694
      %v696 = vpop.f32.mrf.mxu0
      %v697 = vadd.f32 0.0, %v696
      %v698 = vpop.f32.mrf.mxu0
      %v699 = vpop.f32.mrf.mxu0
      %700 = vdwg.mxu0
      %701 = vmatprep.subr.bf16.mxu0 %v491
      %702 = vmatpush1.bf16.msra.mxu0 %v490
      %703 = vmatprep.subr.bf16.mxu0 %v487
      %704 = vmatpush1.bf16.msra.mxu0 %v486
      %705 = vmatprep.subr.bf16.mxu0 %v483
      %706 = vmatpush1.bf16.msra.mxu0 %v482
      %707 = vmatprep.subr.bf16.mxu0 %v479
      %708 = vmatpush1.bf16.msra.mxu0 %v478
      %709 = vmatprep.subr.bf16.mxu0 %v475
      %710 = vmatpush1.bf16.msra.mxu0 %v474
      %711 = vmatprep.subr.bf16.mxu0 %v471
      %712 = vmatpush1.bf16.msra.mxu0 %v470
      %713 = vmatprep.subr.bf16.mxu0 %v467
      %714 = vmatpush1.bf16.msra.mxu0 %v466
      %715 = vmatprep.subr.bf16.mxu0 %v463
      %716 = vmatpush1.bf16.msra.mxu0 %v462
      %717 = vmatprep.subr.bf16.mxu0 0
      %718 = vmatpush2.bf16.msra.mxu0 0
      %719 = vmatprep.subr.bf16.mxu0 0
      %720 = vmatpush2.bf16.msra.mxu0 0
      %721 = vmatprep.subr.bf16.mxu0 0
      %722 = vmatpush2.bf16.msra.mxu0 0
      %723 = vmatprep.subr.bf16.mxu0 0
      %724 = vmatpush2.bf16.msra.mxu0 0
      %725 = vmatprep.subr.bf16.mxu0 0
      %726 = vmatpush2.bf16.msra.mxu0 0
      %727 = vmatprep.subr.bf16.mxu0 0
      %728 = vmatpush2.bf16.msra.mxu0 0
      %729 = vmatprep.subr.bf16.mxu0 0
      %730 = vmatpush2.bf16.msra.mxu0 0
      %731 = vmatprep.subr.bf16.mxu0 0
      %732 = vmatpush2.bf16.msra.mxu0 0
      %733 = vmatprep.mubr.bf16.mxu0 0
      %734 = vmatmul.mubr.bf16.gmra.mxu0 %v645
      %v735 = vpop.f32.mrf.mxu0
      %v736 = vadd.f32 0.0, %v735
      %v737 = vpop.f32.mrf.mxu0
      %v738 = vadd.f32 0.0, %v737
      %v739 = vpop.f32.mrf.mxu0
      %v740 = vpop.f32.mrf.mxu0
      %741 = vdwg.mxu0
      %v742 = vadd.f32 %v656, %v695
      %v743 = vadd.f32 %v657, %v697
      %v744 = vadd.f32 %v658, %v736
      %v745 = vadd.f32 %v659, %v738
      %v746 = vxor.u32 %v742, 2147483648
      %v747 = vmul.f32 %v746, 1.442695
      %v748 = vpow.pop %v747
      %v749 = vadd.f32 %v748, 1.0
      %v750 = vrcp.pop %v749
      %v751 = vmul.f32 1.0, %v750
      %v752 = vxor.u32 %v743, 2147483648
      %v753 = vmul.f32 %v752, 1.442695
      %v754 = vpow.pop %v753
      %v755 = vadd.f32 %v754, 1.0
      %v756 = vrcp.pop %v755
      %v757 = vmul.f32 1.0, %v756
      %v758 = vtanh.pop %v744
      %v759 = vxor.u32 %v745, 2147483648
      %v760 = vmul.f32 %v759, 1.442695
      %v761 = vpow.pop %v760
      %v762 = vadd.f32 %v761, 1.0
      %v763 = vrcp.pop %v762
      %v764 = vmul.f32 1.0, %v763
      %v765 = vmul.f32 %v757, %v646
      %v766 = vmul.f32 %v751, %v758
      %v767 = vadd.f32 %v765, %v766
      %v768 = vtanh.pop %v767
      %v769 = vmul.f32 %v764, %v768
      %v770 = vstv %s650
      %vm771 = vcmp.gt.s32.totalorder %v314, %v770
      %p772 = scmp.lt.s32.totalorder %s650, 10
      %s773 = scalar_select %p772, 0.0, -inf
      %v774 = vpack.c.bf16 %v769, %v769
      %v775 = vsel %vm771, 1, 0
      %776 = vset.pattern.permute.xlu0 0
      %777 = vperm.xlu0 %776, %v775
      %v778 = vpop.permute.xlu0 %777
      %vm779 = vcmp.eq.s32.totalorder %v778, 1
      %vm780 = vmpackc.low %vm779, %vm779
      %v781 = vsel %vm780, %v774, %v645
      %v782 = vsel %vm779, %v767, %v646
      %v783 = vstv %s773
      %v784 = vsel %vm779, %v769, %v783
      %v785 = vmax.f32 %v648, %v784
      %s786 = scalar_select %p347, 2, 1
      %s787 = sadd.s32 %s350, %s786
      %s788 = smul.u32 %s786, 4
      %s789 = smul.addr %s788, 4
      %s790 = scalar_lea.vmem %s186, %s789
      %v791 = vld [vmem:[%s790] sm:$0xff]
      %v792 = vld [vmem:[%s790 + $0x8] sm:$0xff]
      %v793 = vunpack.c.l.bf16 %v791
      %v794 = vunpack.c.h.bf16 %v791
      %v795 = vunpack.c.l.bf16 %v792
      %v796 = vunpack.c.h.bf16 %v792
      %797 = vmatprep.subr.bf16.mxu0 %v489
      %798 = vmatpush1.bf16.msra.mxu0 %v488
      %799 = vmatprep.subr.bf16.mxu0 %v485
      %800 = vmatpush1.bf16.msra.mxu0 %v484
      %801 = vmatprep.subr.bf16.mxu0 %v481
      %802 = vmatpush1.bf16.msra.mxu0 %v480
      %803 = vmatprep.subr.bf16.mxu0 %v477
      %804 = vmatpush1.bf16.msra.mxu0 %v476
      %805 = vmatprep.subr.bf16.mxu0 %v473
      %806 = vmatpush1.bf16.msra.mxu0 %v472
      %807 = vmatprep.subr.bf16.mxu0 %v469
      %808 = vmatpush1.bf16.msra.mxu0 %v468
      %809 = vmatprep.subr.bf16.mxu0 %v465
      %810 = vmatpush1.bf16.msra.mxu0 %v464
      %811 = vmatprep.subr.bf16.mxu0 %v461
      %812 = vmatpush1.bf16.msra.mxu0 %v460
      %813 = vmatprep.subr.bf16.mxu0 0
      %814 = vmatpush2.bf16.msra.mxu0 0
      %815 = vmatprep.subr.bf16.mxu0 0
      %816 = vmatpush2.bf16.msra.mxu0 0
      %817 = vmatprep.subr.bf16.mxu0 0
      %818 = vmatpush2.bf16.msra.mxu0 0
      %819 = vmatprep.subr.bf16.mxu0 0
      %820 = vmatpush2.bf16.msra.mxu0 0
      %821 = vmatprep.subr.bf16.mxu0 0
      %822 = vmatpush2.bf16.msra.mxu0 0
      %823 = vmatprep.subr.bf16.mxu0 0
      %824 = vmatpush2.bf16.msra.mxu0 0
      %825 = vmatprep.subr.bf16.mxu0 0
      %826 = vmatpush2.bf16.msra.mxu0 0
      %827 = vmatprep.subr.bf16.mxu0 0
      %828 = vmatpush2.bf16.msra.mxu0 0
      %829 = vmatprep.mubr.bf16.mxu0 0
      %830 = vmatmul.mubr.bf16.gmra.mxu0 %v781
      %v831 = vpop.f32.mrf.mxu0
      %v832 = vadd.f32 0.0, %v831
      %v833 = vpop.f32.mrf.mxu0
      %v834 = vadd.f32 0.0, %v833
      %v835 = vpop.f32.mrf.mxu0
      %v836 = vpop.f32.mrf.mxu0
      %837 = vdwg.mxu0
      %838 = vmatprep.subr.bf16.mxu0 %v491
      %839 = vmatpush1.bf16.msra.mxu0 %v490
      %840 = vmatprep.subr.bf16.mxu0 %v487
      %841 = vmatpush1.bf16.msra.mxu0 %v486
      %842 = vmatprep.subr.bf16.mxu0 %v483
      %843 = vmatpush1.bf16.msra.mxu0 %v482
      %844 = vmatprep.subr.bf16.mxu0 %v479
      %845 = vmatpush1.bf16.msra.mxu0 %v478
      %846 = vmatprep.subr.bf16.mxu0 %v475
      %847 = vmatpush1.bf16.msra.mxu0 %v474
      %848 = vmatprep.subr.bf16.mxu0 %v471
      %849 = vmatpush1.bf16.msra.mxu0 %v470
      %850 = vmatprep.subr.bf16.mxu0 %v467
      %851 = vmatpush1.bf16.msra.mxu0 %v466
      %852 = vmatprep.subr.bf16.mxu0 %v463
      %853 = vmatpush1.bf16.msra.mxu0 %v462
      %854 = vmatprep.subr.bf16.mxu0 0
      %855 = vmatpush2.bf16.msra.mxu0 0
      %856 = vmatprep.subr.bf16.mxu0 0
      %857 = vmatpush2.bf16.msra.mxu0 0
      %858 = vmatprep.subr.bf16.mxu0 0
      %859 = vmatpush2.bf16.msra.mxu0 0
      %860 = vmatprep.subr.bf16.mxu0 0
      %861 = vmatpush2.bf16.msra.mxu0 0
      %862 = vmatprep.subr.bf16.mxu0 0
      %863 = vmatpush2.bf16.msra.mxu0 0
      %864 = vmatprep.subr.bf16.mxu0 0
      %865 = vmatpush2.bf16.msra.mxu0 0
      %866 = vmatprep.subr.bf16.mxu0 0
      %867 = vmatpush2.bf16.msra.mxu0 0
      %868 = vmatprep.subr.bf16.mxu0 0
      %869 = vmatpush2.bf16.msra.mxu0 0
      %870 = vmatprep.mubr.bf16.mxu0 0
      %871 = vmatmul.mubr.bf16.gmra.mxu0 %v781
      %v872 = vpop.f32.mrf.mxu0
      %v873 = vadd.f32 0.0, %v872
      %v874 = vpop.f32.mrf.mxu0
      %v875 = vadd.f32 0.0, %v874
      %v876 = vpop.f32.mrf.mxu0
      %v877 = vpop.f32.mrf.mxu0
      %878 = vdwg.mxu0
      %v879 = vadd.f32 %v793, %v832
      %v880 = vadd.f32 %v794, %v834
      %v881 = vadd.f32 %v795, %v873
      %v882 = vadd.f32 %v796, %v875
      %v883 = vxor.u32 %v879, 2147483648
      %v884 = vmul.f32 %v883, 1.442695
      %v885 = vpow.pop %v884
      %v886 = vadd.f32 %v885, 1.0
      %v887 = vrcp.pop %v886
      %v888 = vmul.f32 1.0, %v887
      %v889 = vxor.u32 %v880, 2147483648
      %v890 = vmul.f32 %v889, 1.442695
      %v891 = vpow.pop %v890
      %v892 = vadd.f32 %v891, 1.0
      %v893 = vrcp.pop %v892
      %v894 = vmul.f32 1.0, %v893
      %v895 = vtanh.pop %v881
      %v896 = vxor.u32 %v882, 2147483648
      %v897 = vmul.f32 %v896, 1.442695
      %v898 = vpow.pop %v897
      %v899 = vadd.f32 %v898, 1.0
      %v900 = vrcp.pop %v899
      %v901 = vmul.f32 1.0, %v900
      %v902 = vmul.f32 %v894, %v782
      %v903 = vmul.f32 %v888, %v895
      %v904 = vadd.f32 %v902, %v903
      %v905 = vtanh.pop %v904
      %v906 = vmul.f32 %v901, %v905
      %v907 = vstv %s787
      %vm908 = vcmp.gt.s32.totalorder %v314, %v907
      %p909 = scmp.lt.s32.totalorder %s787, 10
      %s910 = scalar_select %p909, 0.0, -inf
      %v911 = vpack.c.bf16 %v906, %v906
      %v912 = vsel %vm908, 1, 0
      %913 = vset.pattern.permute.xlu0 0
      %914 = vperm.xlu0 %913, %v912
      %v915 = vpop.permute.xlu0 %914
      %vm916 = vcmp.eq.s32.totalorder %v915, 1
      %vm917 = vmpackc.low %vm916, %vm916
      %v918 = vsel %vm917, %v911, %v781
      %v919 = vsel %vm916, %v904, %v782
      %v920 = vstv %s910
      %v921 = vsel %vm916, %v906, %v920
      %v922 = vmax.f32 %v785, %v921
      %s923 = scalar_select %p347, 3, 0
      %s924 = sadd.s32 %s350, %s923
      %s925 = smul.u32 %s923, 4
      %s926 = smul.addr %s925, 4
      %s927 = scalar_lea.vmem %s186, %s926
      %v928 = vld [vmem:[%s927] sm:$0xff]
      %v929 = vld [vmem:[%s927 + $0x8] sm:$0xff]
      %v930 = vunpack.c.l.bf16 %v928
      %v931 = vunpack.c.h.bf16 %v928
      %v932 = vunpack.c.l.bf16 %v929
      %v933 = vunpack.c.h.bf16 %v929
      %934 = vmatprep.subr.bf16.mxu0 %v489
      %935 = vmatpush1.bf16.msra.mxu0 %v488
      %936 = vmatprep.subr.bf16.mxu0 %v485
      %937 = vmatpush1.bf16.msra.mxu0 %v484
      %938 = vmatprep.subr.bf16.mxu0 %v481
      %939 = vmatpush1.bf16.msra.mxu0 %v480
      %940 = vmatprep.subr.bf16.mxu0 %v477
      %941 = vmatpush1.bf16.msra.mxu0 %v476
      %942 = vmatprep.subr.bf16.mxu0 %v473
      %943 = vmatpush1.bf16.msra.mxu0 %v472
      %944 = vmatprep.subr.bf16.mxu0 %v469
      %945 = vmatpush1.bf16.msra.mxu0 %v468
      %946 = vmatprep.subr.bf16.mxu0 %v465
      %947 = vmatpush1.bf16.msra.mxu0 %v464
      %948 = vmatprep.subr.bf16.mxu0 %v461
      %949 = vmatpush1.bf16.msra.mxu0 %v460
      %950 = vmatprep.subr.bf16.mxu0 0
      %951 = vmatpush2.bf16.msra.mxu0 0
      %952 = vmatprep.subr.bf16.mxu0 0
      %953 = vmatpush2.bf16.msra.mxu0 0
      %954 = vmatprep.subr.bf16.mxu0 0
      %955 = vmatpush2.bf16.msra.mxu0 0
      %956 = vmatprep.subr.bf16.mxu0 0
      %957 = vmatpush2.bf16.msra.mxu0 0
      %958 = vmatprep.subr.bf16.mxu0 0
      %959 = vmatpush2.bf16.msra.mxu0 0
      %960 = vmatprep.subr.bf16.mxu0 0
      %961 = vmatpush2.bf16.msra.mxu0 0
      %962 = vmatprep.subr.bf16.mxu0 0
      %963 = vmatpush2.bf16.msra.mxu0 0
      %964 = vmatprep.subr.bf16.mxu0 0
      %965 = vmatpush2.bf16.msra.mxu0 0
      %966 = vmatprep.mubr.bf16.mxu0 0
      %967 = vmatmul.mubr.bf16.gmra.mxu0 %v918
      %v968 = vpop.f32.mrf.mxu0
      %v969 = vadd.f32 0.0, %v968
      %v970 = vpop.f32.mrf.mxu0
      %v971 = vadd.f32 0.0, %v970
      %v972 = vpop.f32.mrf.mxu0
      %v973 = vpop.f32.mrf.mxu0
      %974 = vdwg.mxu0
      %975 = vmatprep.subr.bf16.mxu0 %v491
      %976 = vmatpush1.bf16.msra.mxu0 %v490
      %977 = vmatprep.subr.bf16.mxu0 %v487
      %978 = vmatpush1.bf16.msra.mxu0 %v486
      %979 = vmatprep.subr.bf16.mxu0 %v483
      %980 = vmatpush1.bf16.msra.mxu0 %v482
      %981 = vmatprep.subr.bf16.mxu0 %v479
      %982 = vmatpush1.bf16.msra.mxu0 %v478
      %983 = vmatprep.subr.bf16.mxu0 %v475
      %984 = vmatpush1.bf16.msra.mxu0 %v474
      %985 = vmatprep.subr.bf16.mxu0 %v471
      %986 = vmatpush1.bf16.msra.mxu0 %v470
      %987 = vmatprep.subr.bf16.mxu0 %v467
      %988 = vmatpush1.bf16.msra.mxu0 %v466
      %989 = vmatprep.subr.bf16.mxu0 %v463
      %990 = vmatpush1.bf16.msra.mxu0 %v462
      %991 = vmatprep.subr.bf16.mxu0 0
      %992 = vmatpush2.bf16.msra.mxu0 0
      %993 = vmatprep.subr.bf16.mxu0 0
      %994 = vmatpush2.bf16.msra.mxu0 0
      %995 = vmatprep.subr.bf16.mxu0 0
      %996 = vmatpush2.bf16.msra.mxu0 0
      %997 = vmatprep.subr.bf16.mxu0 0
      %998 = vmatpush2.bf16.msra.mxu0 0
      %999 = vmatprep.subr.bf16.mxu0 0
      %1000 = vmatpush2.bf16.msra.mxu0 0
      %1001 = vmatprep.subr.bf16.mxu0 0
      %1002 = vmatpush2.bf16.msra.mxu0 0
      %1003 = vmatprep.subr.bf16.mxu0 0
      %1004 = vmatpush2.bf16.msra.mxu0 0
      %1005 = vmatprep.subr.bf16.mxu0 0
      %1006 = vmatpush2.bf16.msra.mxu0 0
      %1007 = vmatprep.mubr.bf16.mxu0 0
      %1008 = vmatmul.mubr.bf16.gmra.mxu0 %v918
      %v1009 = vpop.f32.mrf.mxu0
      %v1010 = vadd.f32 0.0, %v1009
      %v1011 = vpop.f32.mrf.mxu0
      %v1012 = vadd.f32 0.0, %v1011
      %v1013 = vpop.f32.mrf.mxu0
      %v1014 = vpop.f32.mrf.mxu0
      %1015 = vdwg.mxu0
      %v1016 = vadd.f32 %v930, %v969
      %v1017 = vadd.f32 %v931, %v971
      %v1018 = vadd.f32 %v932, %v1010
      %v1019 = vadd.f32 %v933, %v1012
      %v1020 = vxor.u32 %v1016, 2147483648
      %v1021 = vmul.f32 %v1020, 1.442695
      %v1022 = vpow.pop %v1021
      %v1023 = vadd.f32 %v1022, 1.0
      %v1024 = vrcp.pop %v1023
      %v1025 = vmul.f32 1.0, %v1024
      %v1026 = vxor.u32 %v1017, 2147483648
      %v1027 = vmul.f32 %v1026, 1.442695
      %v1028 = vpow.pop %v1027
      %v1029 = vadd.f32 %v1028, 1.0
      %v1030 = vrcp.pop %v1029
      %v1031 = vmul.f32 1.0, %v1030
      %v1032 = vtanh.pop %v1018
      %v1033 = vxor.u32 %v1019, 2147483648
      %v1034 = vmul.f32 %v1033, 1.442695
      %v1035 = vpow.pop %v1034
      %v1036 = vadd.f32 %v1035, 1.0
      %v1037 = vrcp.pop %v1036
      %v1038 = vmul.f32 1.0, %v1037
      %v1039 = vmul.f32 %v1031, %v919
      %v1040 = vmul.f32 %v1025, %v1032
      %v1041 = vadd.f32 %v1039, %v1040
      %v1042 = vtanh.pop %v1041
      %v1043 = vmul.f32 %v1038, %v1042
      %v1044 = vstv %s924
      %vm1045 = vcmp.gt.s32.totalorder %v314, %v1044
      %p1046 = scmp.lt.s32.totalorder %s924, 10
      %s1047 = scalar_select %p1046, 0.0, -inf
      %v1048 = vpack.c.bf16 %v1043, %v1043
      %v1049 = vsel %vm1045, 1, 0
      %1050 = vset.pattern.permute.xlu0 0
      %1051 = vperm.xlu0 %1050, %v1049
      %v1052 = vpop.permute.xlu0 %1051
      %vm1053 = vcmp.eq.s32.totalorder %v1052, 1
      %vm1054 = vmpackc.low %vm1053, %vm1053
      %v1055 = vsel %vm1054, %v1048, %v918
      %v1056 = vsel %vm1053, %v1041, %v919
      %v1057 = vstv %s1047
      %v1058 = vsel %vm1053, %v1043, %v1057
      %v1059 = vmax.f32 %v922, %v1058
      %1060 = vst [vmem:[#allocation4] sm:$0xf] %v1055
      %1061 = vst [vmem:[#allocation5] sm:$0xff] %v1056
      // Predicated region
      $region67: #{blstm_encoder_forward.3} parent=27 // pred_check
        %p1062 = pneg %p196
      $region68: #{blstm_encoder_forward.3} parent=27 // pred_check_branch
        %1064 = sbr.rel (%p1062) target = $region70
      $region69: #{blstm_encoder_forward.3} parent=27 // pred_region
        %1065 = vst [vmem:[%s194] sm:$0xff] %v1059
      $region70: #{blstm_encoder_forward.3} parent=27 // pred_fallthru
        _
      %p1066 = scmp.gt.s32.totalorder %s19, 0
      // Predicated region
      $region71: #{blstm_encoder_forward.3} parent=27 // pred_check
        %p1067 = pneg %p1066
      $region72: #{blstm_encoder_forward.3} parent=27 // pred_check_branch
        %1069 = sbr.rel (%p1067) target = $region74
      $region73: #{blstm_encoder_forward.3} parent=27 // pred_region
        %v1070 = vld [vmem:[%s194] sm:$0xff]
        %v1071 = vmax.f32 %v1070, %v1059
        %1072 = vst [vmem:[%s194] sm:$0xff] %v1071
      $region74: #{blstm_encoder_forward.3} parent=27 // pred_fallthru
        _
      %p1073 = scmp.lt.s32.totalorder %s18, 1
      %s1074 = scalar_select %p1073, %s18, 1
      %s1075 = smul.addr %s1074, 8
      %s1076 = scalar_lea.vmem %s3, %s1075
      // Predicated region
      $region75: #{blstm_encoder_forward.3} parent=27 // pred_check
        %p1077 = pneg %p99
      $region76: #{blstm_encoder_forward.3} parent=27 // pred_check_branch
        %1079 = sbr.rel (%p1077) target = $region78
      $region77: #{blstm_encoder_forward.3} parent=27 // pred_region
        _
      $region78: #{blstm_encoder_forward.3} parent=27 // pred_fallthru
        _
    $region28: #{blstm_encoder_forward.3} parent=5 // pred_fallthru
      _
    %p1080 = scmp.le.s32.totalorder 2, %s9
    // Predicated region
    $region79: #{blstm_encoder_forward.3} parent=5 // pred_check
      %p1081 = pneg %p1080
    $region80: #{blstm_encoder_forward.3} parent=5 // pred_check_branch
      %1083 = sbr.rel (%p1081) target = $region82
    $region81: #{blstm_encoder_forward.3} parent=5 // pred_region
      %s1084 = ssub.s32 %s9, 2
      // Predicated region
      $region83: #{blstm_encoder_forward.3} parent=81 // pred_check
        %p1085 = pneg %p105
      $region84: #{blstm_encoder_forward.3} parent=81 // pred_check_branch
        %1087 = sbr.rel (%p1085) target = $region86
      $region85: #{blstm_encoder_forward.3} parent=81 // pred_region
        %p1088 = scmp.lt.s32.totalorder %s20, 1
        %s1089 = scalar_select %p1088, %s20, 1
        %s1090 = smul.addr %s1089, 8
        %s1091 = scalar_lea.vmem %s3, %s1090
      $region86: #{blstm_encoder_forward.3} parent=81 // pred_fallthru
        _
    $region82: #{blstm_encoder_forward.3} parent=5 // pred_fallthru
      _
  $region6: #{blstm_encoder_forward.3} parent=0 // loop_footer
    %s13 = sadd.s32 1, %s9
  $region7: #{blstm_encoder_forward.3} parent=0 // loop_footer_branch
    %8 = sbr.rel target = $region3
  $region8: #{blstm_encoder_forward.3} parent=0 // loop_exit
    _
  %1092 = vsyncmov [#allocation3]
  %s1093 = vpop.sfrf %1092
  %p1094 = scmp.eq.s32.totalorder %s1093, 0
  %p1095 = pneg %p1094
  %1097 = shalt.err (%p1095)

</llo_original>
